<compile_context>
chip_gen: v7x
topology: tpu7x:2x2x1
jax: 0.10.0
libtpu: 0.0.40
codegen_flags: <defaults>
</compile_context>

<pallas_src>
import jax
import jax.numpy as jnp
from jax.experimental import pallas as pl
from jax.experimental.pallas import tpu as pltpu


def _fold_rows(v):
    """(rows, 128) -> (8, 128): tree-sum of sublane groups (pure vreg adds)."""
    rows = v.shape[0]
    parts = [v[i * 8:(i + 1) * 8, :] for i in range(rows // 8)]
    while len(parts) > 1:
        nxt = [parts[j] + parts[j + 1] for j in range(0, len(parts) - 1, 2)]
        if len(parts) % 2:
            nxt.append(parts[-1])
        parts = nxt
    return parts[0]


def _marginal_loss_kernel(mask_sref, pad_sref,            # SMEM scalar prefetch
                          net_ref, lab_ref,               # VMEM inputs
                          ce_ref, refv_ref, segv_ref, intv_ref,   # outputs
                          ce_sc, ref_sc, seg_sc, int_sc):         # scratch
    C = net_ref.shape[1]
    b = pl.program_id(0)
    t = pl.program_id(2)

    # Per-(sample, chunk) accumulator init; t is the innermost "arbitrary" axis.
    @pl.when(t == 0)
    def _init():
        ce_sc[...] = jnp.zeros_like(ce_sc)
        ref_sc[...] = jnp.zeros_like(ref_sc)
        seg_sc[...] = jnp.zeros_like(seg_sc)
        int_sc[...] = jnp.zeros_like(int_sc)

    lab = lab_ref[0]                                  # (rows, 128) int32 labels
    pad = pad_sref[b].astype(jnp.float32)             # scalar: large - k_b

    zero = jnp.float32(0.0)
    one = jnp.float32(1.0)
    neg_big = jnp.float32(-1e30)

    # Class presence as SMEM scalars -> splat on use (no DMA'd (C,1,1) blocks).
    present = [mask_sref[b * C + c] > 0 for c in range(C)]
    neg = [jnp.where(present[c], zero, neg_big) for c in range(C)]

    # Native-dtype DMA, f32 compute (v5e has no bf16 VALU/EUP).
    x = [net_ref[0, c].astype(jnp.float32) for c in range(C)]   # (rows, 128)

    # merge_prediction: absent foreground logits fold into background.
    absent_sum = zero
    for c in range(1, C):
        absent_sum = absent_sum + x[c] * jnp.where(present[c], zero, one)
    L = [x[0] + absent_sum] + [x[c] for c in range(1, C)]

    # Partial softmax over present classes (stable: max over present logits).
    Leff = [L[c] + neg[c] for c in range(C)]
    Mx = Leff[0]
    for c in range(1, C):
        Mx = jnp.maximum(Mx, Leff[c])
    e = [jnp.exp(Leff[c] - Mx) for c in range(C)]      # 0 on absent channels
    s = e[0]
    for c in range(1, C):
        s = s + e[c]                                   # s >= 1 always
    inv = pl.reciprocal(s, approx=True)                # EUP vrcp
    inv = inv * (jnp.float32(2.0) - s * inv)           # 1 Newton step (~f32 exact)
    P = [e[c] * inv for c in range(C)]                 # dice softmax input

    # Cross entropy: log-partition over present classes + `pad` zero-logit
    # padding channels.  Branch on pad so neither branch can hit log(0)/0*inf.
    Mce = jnp.maximum(Mx, zero)
    logZ_pad = Mce + jnp.log(s * jnp.exp(Mx - Mce) + pad * jnp.exp(-Mce))
    logZ_nop = Mx + jnp.log(s)
    logZ = jnp.where(pad > 0, logZ_pad, logZ_nop)

    # One-hot target rebuilt from labels (labels only hit present classes, so
    # target*mask == target and sum_c target == 1 per voxel).
    eq = [lab == c for c in range(C)]
    Lsel = jnp.where(eq[0], L[0], zero)
    for c in range(1, C):
        Lsel = jnp.where(eq[c], L[c], Lsel)
    ce_vox = logZ - Lsel                               # (rows, 128)

    # One-vreg-per-channel accumulators: fold the tile to (8,128) first (VALU
    # tree), then a single small += per quantity.
    ce_sc[0] += _fold_rows(ce_vox)
    for c in range(C):
        g = eq[c].astype(jnp.float32)
        ref_sc[c] += _fold_rows(g)
        seg_sc[c] += _fold_rows(P[c])
        int_sc[c] += _fold_rows(g * P[c])

    # Cross-lane/sublane reductions + narrow stores run once per (b, chunk).
    @pl.when(t == pl.num_programs(2) - 1)
    def _fin():
        ce_ref[0] = jnp.sum(jnp.sum(ce_sc[...], axis=2, keepdims=True),
                            axis=1, keepdims=True)                 # (1,1,1)
        refv_ref[0, 0] = jnp.sum(jnp.sum(ref_sc[...], axis=2, keepdims=True),
                                 axis=1, keepdims=True)             # (C,1,1)
        segv_ref[0, 0] = jnp.sum(jnp.sum(seg_sc[...], axis=2, keepdims=True),
                                 axis=1, keepdims=True)
        intv_ref[0, 0] = jnp.sum(jnp.sum(int_sc[...], axis=2, keepdims=True),
                                 axis=1, keepdims=True)


def dc_ce_marginal_loss(net_output, target, tile_rows=256, spatial_chunks=None):
    """net_output, target: (B, C, D, H, W), target hard one-hot over C classes.

    tile_rows*128 voxels per grid step.  spatial_chunks adds a second
    "parallel" grid axis (useful on v7x when B is 1/odd); defaults to 2 when
    B == 1 and the tile count allows it.
    """
    B, C, D, H, W = net_output.shape
    assert target.shape == (B, C, D, H, W)
    N = D * H * W
    assert N % 128 == 0, "spatial volume must be a multiple of 128"
    R = N // 128
    assert R % 8 == 0, "spatial volume must be a multiple of 1024"

    tr = min(tile_rows, R)
    tr -= tr % 8
    while tr > 8 and R % tr != 0:
        tr -= 8
    tile_rows = max(tr, 8)
    assert R % tile_rows == 0 and tile_rows % 8 == 0
    n_tiles = R // tile_rows

    if spatial_chunks is None:
        spatial_chunks = 2 if (B == 1 and n_tiles % 2 == 0) else 1
    assert n_tiles % spatial_chunks == 0
    n_inner = n_tiles // spatial_chunks

    # Lane-dense layout; logits keep their native dtype (feed bf16 upstream to
    # halve HBM traffic — the kernel casts to f32 after load).
    net4 = net_output.reshape(B, C, R, 128)

    # Compact integer labels: target HBM traffic drops from C*4 to 4 B/voxel.
    labels = jnp.argmax(target, axis=1).astype(jnp.int32)         # (B, D, H, W)
    lab3 = labels.reshape(B, R, 128)

    # partial_onehot bookkeeping from the labels (argmax-based, as in PyTorch);
    # the broadcast-compare-reduce fuses, no (B, N, C) temporary.
    cls = jnp.arange(C, dtype=jnp.int32)
    mask = jnp.any(lab3[:, None, :, :] == cls[None, :, None, None], axis=(2, 3))
    maskf = mask.astype(jnp.float32)                               # (B, C)
    k = jnp.sum(maskf, axis=1)                                     # (B,)
    pad = jnp.max(k) - k                                           # large - k
    mask_s = mask.astype(jnp.int32).reshape(-1)                    # (B*C,) SMEM
    pad_s = pad.astype(jnp.int32)                                  # (B,)   SMEM

    grid = (B, spatial_chunks, n_inner)

    # Explicit VMEM budget: double-buffered inputs + tiny accumulators.
    vmem_est = (2 * C * tile_rows * 128 * net4.dtype.itemsize
                + 2 * tile_rows * 128 * 4
                + (3 * C + 1) * 8 * 128 * 4)
    vmem_limit = min(int(vmem_est) + (16 << 20), 64 << 20)

    ce_acc, ref_acc, seg_acc, int_acc = pl.pallas_call(
        _marginal_loss_kernel,
        out_shape=(
            jax.ShapeDtypeStruct((B, spatial_chunks, 1, 1), jnp.float32),
            jax.ShapeDtypeStruct((B, spatial_chunks, C, 1, 1), jnp.float32),
            jax.ShapeDtypeStruct((B, spatial_chunks, C, 1, 1), jnp.float32),
            jax.ShapeDtypeStruct((B, spatial_chunks, C, 1, 1), jnp.float32),
        ),
        grid_spec=pltpu.PrefetchScalarGridSpec(
            num_scalar_prefetch=2,
            grid=grid,
            in_specs=[
                pl.BlockSpec((1, C, tile_rows, 128),
                             lambda b, o, t, m, p: (b, 0, o * n_inner + t, 0)),
                pl.BlockSpec((1, tile_rows, 128),
                             lambda b, o, t, m, p: (b, o * n_inner + t, 0)),
            ],
            out_specs=(
                pl.BlockSpec((1, 1, 1, 1),
                             lambda b, o, t, m, p: (b, o, 0, 0)),
                pl.BlockSpec((1, 1, C, 1, 1),
                             lambda b, o, t, m, p: (b, o, 0, 0, 0)),
                pl.BlockSpec((1, 1, C, 1, 1),
                             lambda b, o, t, m, p: (b, o, 0, 0, 0)),
                pl.BlockSpec((1, 1, C, 1, 1),
                             lambda b, o, t, m, p: (b, o, 0, 0, 0)),
            ),
            scratch_shapes=[
                pltpu.VMEM((1, 8, 128), jnp.float32),
                pltpu.VMEM((C, 8, 128), jnp.float32),
                pltpu.VMEM((C, 8, 128), jnp.float32),
                pltpu.VMEM((C, 8, 128), jnp.float32),
            ],
        ),
        compiler_params=pltpu.CompilerParams(
            dimension_semantics=("parallel", "parallel", "arbitrary"),
            vmem_limit_bytes=vmem_limit),
    )(mask_s, pad_s, net4, lab3)

    # Tiny host-side glue.
    ce_loss = jnp.sum(ce_acc) / (B * N)
    ref_v = jnp.sum(ref_acc, axis=1)[:, :, 0, 0]                   # (B, C)
    seg_v = jnp.sum(seg_acc, axis=1)[:, :, 0, 0]
    int_v = jnp.sum(int_acc, axis=1)[:, :, 0, 0]
    dice_c = 2.0 * int_v / (ref_v + seg_v + 1e-5)
    per_sample_dice_loss = 1.0 - jnp.sum(dice_c * maskf, axis=1) / k
    dc_loss = jnp.mean(per_sample_dice_loss)
    return 0.5 * ce_loss + 0.5 * dc_loss


def _reference_loss(net_output, target):
    """Pure-JAX reference of the same (one-hot, masked) math, for validation."""
    B, C, D, H, W = net_output.shape
    N = D * H * W
    net = net_output.reshape(B, C, N).astype(jnp.float32)
    labels = jnp.argmax(target.reshape(B, C, N), axis=1)
    cls = jnp.arange(C)
    mask = jnp.any(labels[:, None, :] == cls[None, :, None], axis=-1
                   ).astype(jnp.float32)                            # (B, C)
    k = mask.sum(axis=1)
    pad = (jnp.max(k) - k)[:, None, None]
    m = mask[:, :, None]
    is_fg = (cls > 0)[None, :, None]
    absent_sum = jnp.sum(net * (1.0 - m) * is_fg, axis=1, keepdims=True)
    L = net + (cls == 0)[None, :, None] * absent_sum
    L_eff = jnp.where(m > 0, L, jnp.float32(-1e30))
    Mx = jnp.max(L_eff, axis=1, keepdims=True)
    e = jnp.exp(L_eff - Mx)
    s = jnp.sum(e, axis=1, keepdims=True)
    P = e / s
    Mce = jnp.maximum(Mx, 0.0)
    logZ_pad = Mce + jnp.log(s * jnp.exp(Mx - Mce) + pad * jnp.exp(-Mce))
    logZ = jnp.where(pad > 0, logZ_pad, Mx + jnp.log(s))
    g = (labels[:, None, :] == cls[None, :, None]).astype(jnp.float32)
    L_lab = jnp.sum(g * L, axis=1, keepdims=True)
    ce = jnp.mean(logZ - L_lab)
    ref_v = jnp.sum(g, axis=2)
    seg_v = jnp.sum(P, axis=2)
    int_v = jnp.sum(g * P, axis=2)
    dice = 2.0 * int_v / (ref_v + seg_v + 1e-5)
    dc = jnp.mean(1.0 - jnp.sum(dice * mask, axis=1) / k)
    return 0.5 * ce + 0.5 * dc


if __name__ == "__main__":
    # Loss module has no learnable parameters; default_task is just the list
    # of foreground class names (class index c <-> default_task[c-1]).
    key = jax.random.PRNGKey(0)
    k1, k2 = jax.random.split(key)
    B, C, D, H, W = 2, 4, 8, 16, 16          # C = background + 3 tasks, N=2048

    labels = jax.random.randint(k1, (B, D, H, W), 0, C)
    # Make class 3 absent from sample 0 so the marginal merge path is exercised.
    labels = labels.at[0].set(jnp.where(labels[0] == 3, 0, labels[0]))
    # Guarantee background is present in every sample (module assumption).
    labels = labels.at[:, 0, 0, 0].set(0)
    target = jnp.transpose(jax.nn.one_hot(labels, C, dtype=jnp.float32),
                           (0, 4, 1, 2, 3))                    # (B, C, D, H, W)
    net_output = jax.random.normal(k2, (B, C, D, H, W), dtype=jnp.float32)

    ref = _reference_loss(net_output, target)
    # Multi-tile spatial path, chunked-parallel path, and default big-tile
    # path — all validated against the pure-JAX reference.
    loss_multi = jax.block_until_ready(
        dc_ce_marginal_loss(net_output, target, tile_rows=8))
    loss_chunk = jax.block_until_ready(
        dc_ce_marginal_loss(net_output, target, tile_rows=8, spatial_chunks=2))
    loss_default = jax.block_until_ready(
        dc_ce_marginal_loss(net_output, target))
    for loss in (loss_multi, loss_chunk, loss_default):
        assert jnp.isfinite(loss), loss
        assert jnp.allclose(loss, ref, atol=1e-5, rtol=1e-5), (loss, ref)
    print("KERNEL_OK")
</pallas_src>

<mosaic_0001>
module attributes {stable_mosaic.version = 11 : i64} {
  func.func @_marginal_loss_kernel(%arg0: i32, %arg1: i32, %arg2: i32, %arg3: memref<8xi32, #tpu.memory_space<smem>>, %arg4: memref<2xi32, #tpu.memory_space<smem>>, %arg5: memref<1x4x8x128xf32, #tpu.memory_space<vmem>>, %arg6: memref<1x8x128xi32, #tpu.memory_space<vmem>>, %arg7: memref<1x1x1x1xf32, #tpu.memory_space<vmem>>, %arg8: memref<1x1x4x1x1xf32, #tpu.memory_space<vmem>>, %arg9: memref<1x1x4x1x1xf32, #tpu.memory_space<vmem>>, %arg10: memref<1x1x4x1x1xf32, #tpu.memory_space<vmem>>, %arg11: memref<1x8x128xf32, #tpu.memory_space<vmem>>, %arg12: memref<4x8x128xf32, #tpu.memory_space<vmem>>, %arg13: memref<4x8x128xf32, #tpu.memory_space<vmem>>, %arg14: memref<4x8x128xf32, #tpu.memory_space<vmem>>) attributes {dimension_semantics = [#tpu.dimension_semantics<parallel>, #tpu.dimension_semantics<parallel>, #tpu.dimension_semantics<arbitrary>], iteration_bounds = array<i64: 2, 1, 2>, scalar_prefetch = 2 : i64, scratch_operands = 4 : i64, tpu.core_type = #tpu.core_type<tc>, window_params = [{transform_indices = @transform_0, window_bounds = array<i64: 1, 4, 8, 128>}, {transform_indices = @transform_1, window_bounds = array<i64: 1, 8, 128>}, {transform_indices = @transform_2, window_bounds = array<i64: 1, 1, 1, 1>}, {transform_indices = @transform_3, window_bounds = array<i64: 1, 1, 4, 1, 1>}, {transform_indices = @transform_4, window_bounds = array<i64: 1, 1, 4, 1, 1>}, {transform_indices = @transform_5, window_bounds = array<i64: 1, 1, 4, 1, 1>}]} {
    %c0_i32 = arith.constant 0 : i32
    %0 = arith.cmpi eq, %arg2, %c0_i32 : i32
    %1 = arith.extui %0 : i1 to i32
    %c0_i32_0 = arith.constant 0 : i32
    %2 = arith.cmpi ne, %1, %c0_i32_0 : i32
    scf.if %2 {
      %cst_127 = arith.constant 0.000000e+00 : f32
      %209 = vector.broadcast %cst_127 : f32 to vector<1x8x128xf32>
      %c0_128 = arith.constant 0 : index
      %c0_129 = arith.constant 0 : index
      %c0_130 = arith.constant 0 : index
      %210 = vector.load %arg11[%c0_128, %c0_129, %c0_130] : memref<1x8x128xf32, #tpu.memory_space<vmem>>, vector<1x8x128xf32>
      tpu.vector_store %arg11[%c0_128, %c0_129, %c0_130], %209 {strides = array<i32>} : memref<1x8x128xf32, #tpu.memory_space<vmem>>, vector<1x8x128xf32>,
      %cst_131 = arith.constant 0.000000e+00 : f32
      %211 = vector.broadcast %cst_131 : f32 to vector<4x8x128xf32>
      %c0_132 = arith.constant 0 : index
      %c0_133 = arith.constant 0 : index
      %c0_134 = arith.constant 0 : index
      %212 = vector.load %arg12[%c0_132, %c0_133, %c0_134] : memref<4x8x128xf32, #tpu.memory_space<vmem>>, vector<4x8x128xf32>
      tpu.vector_store %arg12[%c0_132, %c0_133, %c0_134], %211 {strides = array<i32>} : memref<4x8x128xf32, #tpu.memory_space<vmem>>, vector<4x8x128xf32>,
      %cst_135 = arith.constant 0.000000e+00 : f32
      %213 = vector.broadcast %cst_135 : f32 to vector<4x8x128xf32>
      %c0_136 = arith.constant 0 : index
      %c0_137 = arith.constant 0 : index
      %c0_138 = arith.constant 0 : index
      %214 = vector.load %arg13[%c0_136, %c0_137, %c0_138] : memref<4x8x128xf32, #tpu.memory_space<vmem>>, vector<4x8x128xf32>
      tpu.vector_store %arg13[%c0_136, %c0_137, %c0_138], %213 {strides = array<i32>} : memref<4x8x128xf32, #tpu.memory_space<vmem>>, vector<4x8x128xf32>,
      %cst_139 = arith.constant 0.000000e+00 : f32
      %215 = vector.broadcast %cst_139 : f32 to vector<4x8x128xf32>
      %c0_140 = arith.constant 0 : index
      %c0_141 = arith.constant 0 : index
      %c0_142 = arith.constant 0 : index
      %216 = vector.load %arg14[%c0_140, %c0_141, %c0_142] : memref<4x8x128xf32, #tpu.memory_space<vmem>>, vector<4x8x128xf32>
      tpu.vector_store %arg14[%c0_140, %c0_141, %c0_142], %215 {strides = array<i32>} : memref<4x8x128xf32, #tpu.memory_space<vmem>>, vector<4x8x128xf32>,
    } else {
    }
    %c0 = arith.constant 0 : index
    %c0_1 = arith.constant 0 : index
    %c0_2 = arith.constant 0 : index
    %3 = vector.load %arg6[%c0, %c0_1, %c0_2] : memref<1x8x128xi32, #tpu.memory_space<vmem>>, vector<1x8x128xi32>
    %4 = vector.shape_cast %3 : vector<1x8x128xi32> to vector<8x128xi32>
    %5 = arith.index_cast %arg0 : i32 to index
    %6 = memref.load %arg4[%5] : memref<2xi32, #tpu.memory_space<smem>>
    %7 = arith.sitofp %6 : i32 to f32
    %c4_i32 = arith.constant 4 : i32
    %8 = arith.muli %arg0, %c4_i32 : i32
    %c0_i32_3 = arith.constant 0 : i32
    %9 = arith.addi %8, %c0_i32_3 : i32
    %10 = arith.index_cast %9 : i32 to index
    %11 = memref.load %arg3[%10] : memref<8xi32, #tpu.memory_space<smem>>
    %c0_i32_4 = arith.constant 0 : i32
    %12 = arith.cmpi sgt, %11, %c0_i32_4 : i32
    %c4_i32_5 = arith.constant 4 : i32
    %13 = arith.muli %arg0, %c4_i32_5 : i32
    %c1_i32 = arith.constant 1 : i32
    %14 = arith.addi %13, %c1_i32 : i32
    %15 = arith.index_cast %14 : i32 to index
    %16 = memref.load %arg3[%15] : memref<8xi32, #tpu.memory_space<smem>>
    %c0_i32_6 = arith.constant 0 : i32
    %17 = arith.cmpi sgt, %16, %c0_i32_6 : i32
    %c4_i32_7 = arith.constant 4 : i32
    %18 = arith.muli %arg0, %c4_i32_7 : i32
    %c2_i32 = arith.constant 2 : i32
    %19 = arith.addi %18, %c2_i32 : i32
    %20 = arith.index_cast %19 : i32 to index
    %21 = memref.load %arg3[%20] : memref<8xi32, #tpu.memory_space<smem>>
    %c0_i32_8 = arith.constant 0 : i32
    %22 = arith.cmpi sgt, %21, %c0_i32_8 : i32
    %c4_i32_9 = arith.constant 4 : i32
    %23 = arith.muli %arg0, %c4_i32_9 : i32
    %c3_i32 = arith.constant 3 : i32
    %24 = arith.addi %23, %c3_i32 : i32
    %25 = arith.index_cast %24 : i32 to index
    %26 = memref.load %arg3[%25] : memref<8xi32, #tpu.memory_space<smem>>
    %c0_i32_10 = arith.constant 0 : i32
    %27 = arith.cmpi sgt, %26, %c0_i32_10 : i32
    %cst = arith.constant 0.000000e+00 : f32
    %cst_11 = arith.constant -1.000000e+30 : f32
    %28 = arith.select %12, %cst, %cst_11 : f32
    %cst_12 = arith.constant 0.000000e+00 : f32
    %cst_13 = arith.constant -1.000000e+30 : f32
    %29 = arith.select %17, %cst_12, %cst_13 : f32
    %cst_14 = arith.constant 0.000000e+00 : f32
    %cst_15 = arith.constant -1.000000e+30 : f32
    %30 = arith.select %22, %cst_14, %cst_15 : f32
    %cst_16 = arith.constant 0.000000e+00 : f32
    %cst_17 = arith.constant -1.000000e+30 : f32
    %31 = arith.select %27, %cst_16, %cst_17 : f32
    %c0_18 = arith.constant 0 : index
    %c0_19 = arith.constant 0 : index
    %c0_20 = arith.constant 0 : index
    %c0_21 = arith.constant 0 : index
    %32 = vector.load %arg5[%c0_18, %c0_19, %c0_20, %c0_21] : memref<1x4x8x128xf32, #tpu.memory_space<vmem>>, vector<1x1x8x128xf32>
    %33 = vector.shape_cast %32 : vector<1x1x8x128xf32> to vector<8x128xf32>
    %c0_22 = arith.constant 0 : index
    %c1 = arith.constant 1 : index
    %c0_23 = arith.constant 0 : index
    %c0_24 = arith.constant 0 : index
    %34 = vector.load %arg5[%c0_22, %c1, %c0_23, %c0_24] : memref<1x4x8x128xf32, #tpu.memory_space<vmem>>, vector<1x1x8x128xf32>
    %35 = vector.shape_cast %34 : vector<1x1x8x128xf32> to vector<8x128xf32>
    %c0_25 = arith.constant 0 : index
    %c2 = arith.constant 2 : index
    %c0_26 = arith.constant 0 : index
    %c0_27 = arith.constant 0 : index
    %36 = vector.load %arg5[%c0_25, %c2, %c0_26, %c0_27] : memref<1x4x8x128xf32, #tpu.memory_space<vmem>>, vector<1x1x8x128xf32>
    %37 = vector.shape_cast %36 : vector<1x1x8x128xf32> to vector<8x128xf32>
    %c0_28 = arith.constant 0 : index
    %c3 = arith.constant 3 : index
    %c0_29 = arith.constant 0 : index
    %c0_30 = arith.constant 0 : index
    %38 = vector.load %arg5[%c0_28, %c3, %c0_29, %c0_30] : memref<1x4x8x128xf32, #tpu.memory_space<vmem>>, vector<1x1x8x128xf32>
    %39 = vector.shape_cast %38 : vector<1x1x8x128xf32> to vector<8x128xf32>
    %cst_31 = arith.constant 0.000000e+00 : f32
    %cst_32 = arith.constant 1.000000e+00 : f32
    %40 = arith.select %17, %cst_31, %cst_32 : f32
    %41 = vector.broadcast %40 : f32 to vector<8x128xf32>
    %42 = arith.mulf %35, %41 : vector<8x128xf32>
    %cst_33 = arith.constant 0.000000e+00 : f32
    %43 = vector.broadcast %cst_33 : f32 to vector<8x128xf32>
    %44 = arith.addf %43, %42 : vector<8x128xf32>
    %cst_34 = arith.constant 0.000000e+00 : f32
    %cst_35 = arith.constant 1.000000e+00 : f32
    %45 = arith.select %22, %cst_34, %cst_35 : f32
    %46 = vector.broadcast %45 : f32 to vector<8x128xf32>
    %47 = arith.mulf %37, %46 : vector<8x128xf32>
    %48 = arith.addf %44, %47 : vector<8x128xf32>
    %cst_36 = arith.constant 0.000000e+00 : f32
    %cst_37 = arith.constant 1.000000e+00 : f32
    %49 = arith.select %27, %cst_36, %cst_37 : f32
    %50 = vector.broadcast %49 : f32 to vector<8x128xf32>
    %51 = arith.mulf %39, %50 : vector<8x128xf32>
    %52 = arith.addf %48, %51 : vector<8x128xf32>
    %53 = arith.addf %33, %52 : vector<8x128xf32>
    %54 = vector.broadcast %28 : f32 to vector<8x128xf32>
    %55 = arith.addf %53, %54 : vector<8x128xf32>
    %56 = vector.broadcast %29 : f32 to vector<8x128xf32>
    %57 = arith.addf %35, %56 : vector<8x128xf32>
    %58 = vector.broadcast %30 : f32 to vector<8x128xf32>
    %59 = arith.addf %37, %58 : vector<8x128xf32>
    %60 = vector.broadcast %31 : f32 to vector<8x128xf32>
    %61 = arith.addf %39, %60 : vector<8x128xf32>
    %62 = arith.maximumf %55, %57 : vector<8x128xf32>
    %63 = arith.maximumf %62, %59 : vector<8x128xf32>
    %64 = arith.maximumf %63, %61 : vector<8x128xf32>
    %65 = arith.subf %55, %64 : vector<8x128xf32>
    %66 = math.exp %65 : vector<8x128xf32>
    %67 = arith.subf %57, %64 : vector<8x128xf32>
    %68 = math.exp %67 : vector<8x128xf32>
    %69 = arith.subf %59, %64 : vector<8x128xf32>
    %70 = math.exp %69 : vector<8x128xf32>
    %71 = arith.subf %61, %64 : vector<8x128xf32>
    %72 = math.exp %71 : vector<8x128xf32>
    %73 = arith.addf %66, %68 : vector<8x128xf32>
    %74 = arith.addf %73, %70 : vector<8x128xf32>
    %75 = arith.addf %74, %72 : vector<8x128xf32>
    %76 = tpu.reciprocal %75 {approx = true} : vector<8x128xf32> -> vector<8x128xf32>
    %77 = arith.mulf %75, %76 : vector<8x128xf32>
    %cst_38 = arith.constant 2.000000e+00 : f32
    %78 = vector.broadcast %cst_38 : f32 to vector<8x128xf32>
    %79 = arith.subf %78, %77 : vector<8x128xf32>
    %80 = arith.mulf %76, %79 : vector<8x128xf32>
    %81 = arith.mulf %66, %80 : vector<8x128xf32>
    %82 = arith.mulf %68, %80 : vector<8x128xf32>
    %83 = arith.mulf %70, %80 : vector<8x128xf32>
    %84 = arith.mulf %72, %80 : vector<8x128xf32>
    %cst_39 = arith.constant 0.000000e+00 : f32
    %85 = vector.broadcast %cst_39 : f32 to vector<8x128xf32>
    %86 = arith.maximumf %64, %85 : vector<8x128xf32>
    %87 = arith.subf %64, %86 : vector<8x128xf32>
    %88 = math.exp %87 : vector<8x128xf32>
    %89 = arith.mulf %75, %88 : vector<8x128xf32>
    %cst_40 = arith.constant 0.000000e+00 : f32
    %90 = vector.broadcast %cst_40 : f32 to vector<8x128xf32>
    %91 = arith.subf %90, %86 : vector<8x128xf32>
    %92 = math.exp %91 : vector<8x128xf32>
    %93 = vector.broadcast %7 : f32 to vector<8x128xf32>
    %94 = arith.mulf %93, %92 : vector<8x128xf32>
    %95 = arith.addf %89, %94 : vector<8x128xf32>
    %96 = math.log %95 : vector<8x128xf32>
    %97 = arith.addf %86, %96 : vector<8x128xf32>
    %98 = math.log %75 : vector<8x128xf32>
    %99 = arith.addf %64, %98 : vector<8x128xf32>
    %cst_41 = arith.constant 0.000000e+00 : f32
    %100 = arith.cmpf ogt, %7, %cst_41 : f32
    %101 = arith.select %100, %97, %99 : vector<8x128xf32>
    %c0_i32_42 = arith.constant 0 : i32
    %102 = vector.broadcast %c0_i32_42 : i32 to vector<8x128xi32>
    %103 = arith.cmpi eq, %4, %102 : vector<8x128xi32>
    %c1_i32_43 = arith.constant 1 : i32
    %104 = vector.broadcast %c1_i32_43 : i32 to vector<8x128xi32>
    %105 = arith.cmpi eq, %4, %104 : vector<8x128xi32>
    %c2_i32_44 = arith.constant 2 : i32
    %106 = vector.broadcast %c2_i32_44 : i32 to vector<8x128xi32>
    %107 = arith.cmpi eq, %4, %106 : vector<8x128xi32>
    %c3_i32_45 = arith.constant 3 : i32
    %108 = vector.broadcast %c3_i32_45 : i32 to vector<8x128xi32>
    %109 = arith.cmpi eq, %4, %108 : vector<8x128xi32>
    %cst_46 = arith.constant 0.000000e+00 : f32
    %110 = vector.broadcast %cst_46 : f32 to vector<8x128xf32>
    %111 = arith.select %103, %53, %110 : vector<8x128xi1>, vector<8x128xf32>
    %112 = arith.select %105, %35, %111 : vector<8x128xi1>, vector<8x128xf32>
    %113 = arith.select %107, %37, %112 : vector<8x128xi1>, vector<8x128xf32>
    %114 = arith.select %109, %39, %113 : vector<8x128xi1>, vector<8x128xf32>
    %115 = arith.subf %101, %114 : vector<8x128xf32>
    %c0_47 = arith.constant 0 : index
    %c0_48 = arith.constant 0 : index
    %c0_49 = arith.constant 0 : index
    %116 = vector.load %arg11[%c0_47, %c0_48, %c0_49] : memref<1x8x128xf32, #tpu.memory_space<vmem>>, vector<1x8x128xf32>
    %117 = vector.shape_cast %116 : vector<1x8x128xf32> to vector<8x128xf32>
    %118 = arith.addf %117, %115 : vector<8x128xf32>
    %c0_50 = arith.constant 0 : index
    %c0_51 = arith.constant 0 : index
    %c0_52 = arith.constant 0 : index
    %119 = vector.load %arg11[%c0_50, %c0_51, %c0_52] : memref<1x8x128xf32, #tpu.memory_space<vmem>>, vector<1x8x128xf32>
    %120 = vector.shape_cast %119 : vector<1x8x128xf32> to vector<8x128xf32>
    %121 = vector.shape_cast %118 : vector<8x128xf32> to vector<1x8x128xf32>
    tpu.vector_store %arg11[%c0_50, %c0_51, %c0_52], %121 {strides = array<i32>} : memref<1x8x128xf32, #tpu.memory_space<vmem>>, vector<1x8x128xf32>,
    %122 = arith.extui %103 : vector<8x128xi1> to vector<8x128xi32>
    %123 = arith.sitofp %122 : vector<8x128xi32> to vector<8x128xf32>
    %c0_53 = arith.constant 0 : index
    %c0_54 = arith.constant 0 : index
    %c0_55 = arith.constant 0 : index
    %124 = vector.load %arg12[%c0_53, %c0_54, %c0_55] : memref<4x8x128xf32, #tpu.memory_space<vmem>>, vector<1x8x128xf32>
    %125 = vector.shape_cast %124 : vector<1x8x128xf32> to vector<8x128xf32>
    %126 = arith.addf %125, %123 : vector<8x128xf32>
    %c0_56 = arith.constant 0 : index
    %c0_57 = arith.constant 0 : index
    %c0_58 = arith.constant 0 : index
    %127 = vector.load %arg12[%c0_56, %c0_57, %c0_58] : memref<4x8x128xf32, #tpu.memory_space<vmem>>, vector<1x8x128xf32>
    %128 = vector.shape_cast %127 : vector<1x8x128xf32> to vector<8x128xf32>
    %129 = vector.shape_cast %126 : vector<8x128xf32> to vector<1x8x128xf32>
    tpu.vector_store %arg12[%c0_56, %c0_57, %c0_58], %129 {strides = array<i32>} : memref<4x8x128xf32, #tpu.memory_space<vmem>>, vector<1x8x128xf32>,
    %c0_59 = arith.constant 0 : index
    %c0_60 = arith.constant 0 : index
    %c0_61 = arith.constant 0 : index
    %130 = vector.load %arg13[%c0_59, %c0_60, %c0_61] : memref<4x8x128xf32, #tpu.memory_space<vmem>>, vector<1x8x128xf32>
    %131 = vector.shape_cast %130 : vector<1x8x128xf32> to vector<8x128xf32>
    %132 = arith.addf %131, %81 : vector<8x128xf32>
    %c0_62 = arith.constant 0 : index
    %c0_63 = arith.constant 0 : index
    %c0_64 = arith.constant 0 : index
    %133 = vector.load %arg13[%c0_62, %c0_63, %c0_64] : memref<4x8x128xf32, #tpu.memory_space<vmem>>, vector<1x8x128xf32>
    %134 = vector.shape_cast %133 : vector<1x8x128xf32> to vector<8x128xf32>
    %135 = vector.shape_cast %132 : vector<8x128xf32> to vector<1x8x128xf32>
    tpu.vector_store %arg13[%c0_62, %c0_63, %c0_64], %135 {strides = array<i32>} : memref<4x8x128xf32, #tpu.memory_space<vmem>>, vector<1x8x128xf32>,
    %c0_65 = arith.constant 0 : index
    %c0_66 = arith.constant 0 : index
    %c0_67 = arith.constant 0 : index
    %136 = vector.load %arg14[%c0_65, %c0_66, %c0_67] : memref<4x8x128xf32, #tpu.memory_space<vmem>>, vector<1x8x128xf32>
    %137 = vector.shape_cast %136 : vector<1x8x128xf32> to vector<8x128xf32>
    %138 = arith.mulf %123, %81 : vector<8x128xf32>
    %139 = arith.addf %137, %138 : vector<8x128xf32>
    %c0_68 = arith.constant 0 : index
    %c0_69 = arith.constant 0 : index
    %c0_70 = arith.constant 0 : index
    %140 = vector.load %arg14[%c0_68, %c0_69, %c0_70] : memref<4x8x128xf32, #tpu.memory_space<vmem>>, vector<1x8x128xf32>
    %141 = vector.shape_cast %140 : vector<1x8x128xf32> to vector<8x128xf32>
    %142 = vector.shape_cast %139 : vector<8x128xf32> to vector<1x8x128xf32>
    tpu.vector_store %arg14[%c0_68, %c0_69, %c0_70], %142 {strides = array<i32>} : memref<4x8x128xf32, #tpu.memory_space<vmem>>, vector<1x8x128xf32>,
    %143 = arith.extui %105 : vector<8x128xi1> to vector<8x128xi32>
    %144 = arith.sitofp %143 : vector<8x128xi32> to vector<8x128xf32>
    %c1_71 = arith.constant 1 : index
    %c0_72 = arith.constant 0 : index
    %c0_73 = arith.constant 0 : index
    %145 = vector.load %arg12[%c1_71, %c0_72, %c0_73] : memref<4x8x128xf32, #tpu.memory_space<vmem>>, vector<1x8x128xf32>
    %146 = vector.shape_cast %145 : vector<1x8x128xf32> to vector<8x128xf32>
    %147 = arith.addf %146, %144 : vector<8x128xf32>
    %c1_74 = arith.constant 1 : index
    %c0_75 = arith.constant 0 : index
    %c0_76 = arith.constant 0 : index
    %148 = vector.load %arg12[%c1_74, %c0_75, %c0_76] : memref<4x8x128xf32, #tpu.memory_space<vmem>>, vector<1x8x128xf32>
    %149 = vector.shape_cast %148 : vector<1x8x128xf32> to vector<8x128xf32>
    %150 = vector.shape_cast %147 : vector<8x128xf32> to vector<1x8x128xf32>
    tpu.vector_store %arg12[%c1_74, %c0_75, %c0_76], %150 {strides = array<i32>} : memref<4x8x128xf32, #tpu.memory_space<vmem>>, vector<1x8x128xf32>,
    %c1_77 = arith.constant 1 : index
    %c0_78 = arith.constant 0 : index
    %c0_79 = arith.constant 0 : index
    %151 = vector.load %arg13[%c1_77, %c0_78, %c0_79] : memref<4x8x128xf32, #tpu.memory_space<vmem>>, vector<1x8x128xf32>
    %152 = vector.shape_cast %151 : vector<1x8x128xf32> to vector<8x128xf32>
    %153 = arith.addf %152, %82 : vector<8x128xf32>
    %c1_80 = arith.constant 1 : index
    %c0_81 = arith.constant 0 : index
    %c0_82 = arith.constant 0 : index
    %154 = vector.load %arg13[%c1_80, %c0_81, %c0_82] : memref<4x8x128xf32, #tpu.memory_space<vmem>>, vector<1x8x128xf32>
    %155 = vector.shape_cast %154 : vector<1x8x128xf32> to vector<8x128xf32>
    %156 = vector.shape_cast %153 : vector<8x128xf32> to vector<1x8x128xf32>
    tpu.vector_store %arg13[%c1_80, %c0_81, %c0_82], %156 {strides = array<i32>} : memref<4x8x128xf32, #tpu.memory_space<vmem>>, vector<1x8x128xf32>,
    %c1_83 = arith.constant 1 : index
    %c0_84 = arith.constant 0 : index
    %c0_85 = arith.constant 0 : index
    %157 = vector.load %arg14[%c1_83, %c0_84, %c0_85] : memref<4x8x128xf32, #tpu.memory_space<vmem>>, vector<1x8x128xf32>
    %158 = vector.shape_cast %157 : vector<1x8x128xf32> to vector<8x128xf32>
    %159 = arith.mulf %144, %82 : vector<8x128xf32>
    %160 = arith.addf %158, %159 : vector<8x128xf32>
    %c1_86 = arith.constant 1 : index
    %c0_87 = arith.constant 0 : index
    %c0_88 = arith.constant 0 : index
    %161 = vector.load %arg14[%c1_86, %c0_87, %c0_88] : memref<4x8x128xf32, #tpu.memory_space<vmem>>, vector<1x8x128xf32>
    %162 = vector.shape_cast %161 : vector<1x8x128xf32> to vector<8x128xf32>
    %163 = vector.shape_cast %160 : vector<8x128xf32> to vector<1x8x128xf32>
    tpu.vector_store %arg14[%c1_86, %c0_87, %c0_88], %163 {strides = array<i32>} : memref<4x8x128xf32, #tpu.memory_space<vmem>>, vector<1x8x128xf32>,
    %164 = arith.extui %107 : vector<8x128xi1> to vector<8x128xi32>
    %165 = arith.sitofp %164 : vector<8x128xi32> to vector<8x128xf32>
    %c2_89 = arith.constant 2 : index
    %c0_90 = arith.constant 0 : index
    %c0_91 = arith.constant 0 : index
    %166 = vector.load %arg12[%c2_89, %c0_90, %c0_91] : memref<4x8x128xf32, #tpu.memory_space<vmem>>, vector<1x8x128xf32>
    %167 = vector.shape_cast %166 : vector<1x8x128xf32> to vector<8x128xf32>
    %168 = arith.addf %167, %165 : vector<8x128xf32>
    %c2_92 = arith.constant 2 : index
    %c0_93 = arith.constant 0 : index
    %c0_94 = arith.constant 0 : index
    %169 = vector.load %arg12[%c2_92, %c0_93, %c0_94] : memref<4x8x128xf32, #tpu.memory_space<vmem>>, vector<1x8x128xf32>
    %170 = vector.shape_cast %169 : vector<1x8x128xf32> to vector<8x128xf32>
    %171 = vector.shape_cast %168 : vector<8x128xf32> to vector<1x8x128xf32>
    tpu.vector_store %arg12[%c2_92, %c0_93, %c0_94], %171 {strides = array<i32>} : memref<4x8x128xf32, #tpu.memory_space<vmem>>, vector<1x8x128xf32>,
    %c2_95 = arith.constant 2 : index
    %c0_96 = arith.constant 0 : index
    %c0_97 = arith.constant 0 : index
    %172 = vector.load %arg13[%c2_95, %c0_96, %c0_97] : memref<4x8x128xf32, #tpu.memory_space<vmem>>, vector<1x8x128xf32>
    %173 = vector.shape_cast %172 : vector<1x8x128xf32> to vector<8x128xf32>
    %174 = arith.addf %173, %83 : vector<8x128xf32>
    %c2_98 = arith.constant 2 : index
    %c0_99 = arith.constant 0 : index
    %c0_100 = arith.constant 0 : index
    %175 = vector.load %arg13[%c2_98, %c0_99, %c0_100] : memref<4x8x128xf32, #tpu.memory_space<vmem>>, vector<1x8x128xf32>
    %176 = vector.shape_cast %175 : vector<1x8x128xf32> to vector<8x128xf32>
    %177 = vector.shape_cast %174 : vector<8x128xf32> to vector<1x8x128xf32>
    tpu.vector_store %arg13[%c2_98, %c0_99, %c0_100], %177 {strides = array<i32>} : memref<4x8x128xf32, #tpu.memory_space<vmem>>, vector<1x8x128xf32>,
    %c2_101 = arith.constant 2 : index
    %c0_102 = arith.constant 0 : index
    %c0_103 = arith.constant 0 : index
    %178 = vector.load %arg14[%c2_101, %c0_102, %c0_103] : memref<4x8x128xf32, #tpu.memory_space<vmem>>, vector<1x8x128xf32>
    %179 = vector.shape_cast %178 : vector<1x8x128xf32> to vector<8x128xf32>
    %180 = arith.mulf %165, %83 : vector<8x128xf32>
    %181 = arith.addf %179, %180 : vector<8x128xf32>
    %c2_104 = arith.constant 2 : index
    %c0_105 = arith.constant 0 : index
    %c0_106 = arith.constant 0 : index
    %182 = vector.load %arg14[%c2_104, %c0_105, %c0_106] : memref<4x8x128xf32, #tpu.memory_space<vmem>>, vector<1x8x128xf32>
    %183 = vector.shape_cast %182 : vector<1x8x128xf32> to vector<8x128xf32>
    %184 = vector.shape_cast %181 : vector<8x128xf32> to vector<1x8x128xf32>
    tpu.vector_store %arg14[%c2_104, %c0_105, %c0_106], %184 {strides = array<i32>} : memref<4x8x128xf32, #tpu.memory_space<vmem>>, vector<1x8x128xf32>,
    %185 = arith.extui %109 : vector<8x128xi1> to vector<8x128xi32>
    %186 = arith.sitofp %185 : vector<8x128xi32> to vector<8x128xf32>
    %c3_107 = arith.constant 3 : index
    %c0_108 = arith.constant 0 : index
    %c0_109 = arith.constant 0 : index
    %187 = vector.load %arg12[%c3_107, %c0_108, %c0_109] : memref<4x8x128xf32, #tpu.memory_space<vmem>>, vector<1x8x128xf32>
    %188 = vector.shape_cast %187 : vector<1x8x128xf32> to vector<8x128xf32>
    %189 = arith.addf %188, %186 : vector<8x128xf32>
    %c3_110 = arith.constant 3 : index
    %c0_111 = arith.constant 0 : index
    %c0_112 = arith.constant 0 : index
    %190 = vector.load %arg12[%c3_110, %c0_111, %c0_112] : memref<4x8x128xf32, #tpu.memory_space<vmem>>, vector<1x8x128xf32>
    %191 = vector.shape_cast %190 : vector<1x8x128xf32> to vector<8x128xf32>
    %192 = vector.shape_cast %189 : vector<8x128xf32> to vector<1x8x128xf32>
    tpu.vector_store %arg12[%c3_110, %c0_111, %c0_112], %192 {strides = array<i32>} : memref<4x8x128xf32, #tpu.memory_space<vmem>>, vector<1x8x128xf32>,
    %c3_113 = arith.constant 3 : index
    %c0_114 = arith.constant 0 : index
    %c0_115 = arith.constant 0 : index
    %193 = vector.load %arg13[%c3_113, %c0_114, %c0_115] : memref<4x8x128xf32, #tpu.memory_space<vmem>>, vector<1x8x128xf32>
    %194 = vector.shape_cast %193 : vector<1x8x128xf32> to vector<8x128xf32>
    %195 = arith.addf %194, %84 : vector<8x128xf32>
    %c3_116 = arith.constant 3 : index
    %c0_117 = arith.constant 0 : index
    %c0_118 = arith.constant 0 : index
    %196 = vector.load %arg13[%c3_116, %c0_117, %c0_118] : memref<4x8x128xf32, #tpu.memory_space<vmem>>, vector<1x8x128xf32>
    %197 = vector.shape_cast %196 : vector<1x8x128xf32> to vector<8x128xf32>
    %198 = vector.shape_cast %195 : vector<8x128xf32> to vector<1x8x128xf32>
    tpu.vector_store %arg13[%c3_116, %c0_117, %c0_118], %198 {strides = array<i32>} : memref<4x8x128xf32, #tpu.memory_space<vmem>>, vector<1x8x128xf32>,
    %c3_119 = arith.constant 3 : index
    %c0_120 = arith.constant 0 : index
    %c0_121 = arith.constant 0 : index
    %199 = vector.load %arg14[%c3_119, %c0_120, %c0_121] : memref<4x8x128xf32, #tpu.memory_space<vmem>>, vector<1x8x128xf32>
    %200 = vector.shape_cast %199 : vector<1x8x128xf32> to vector<8x128xf32>
    %201 = arith.mulf %186, %84 : vector<8x128xf32>
    %202 = arith.addf %200, %201 : vector<8x128xf32>
    %c3_122 = arith.constant 3 : index
    %c0_123 = arith.constant 0 : index
    %c0_124 = arith.constant 0 : index
    %203 = vector.load %arg14[%c3_122, %c0_123, %c0_124] : memref<4x8x128xf32, #tpu.memory_space<vmem>>, vector<1x8x128xf32>
    %204 = vector.shape_cast %203 : vector<1x8x128xf32> to vector<8x128xf32>
    %205 = vector.shape_cast %202 : vector<8x128xf32> to vector<1x8x128xf32>
    tpu.vector_store %arg14[%c3_122, %c0_123, %c0_124], %205 {strides = array<i32>} : memref<4x8x128xf32, #tpu.memory_space<vmem>>, vector<1x8x128xf32>,
    %c1_i32_125 = arith.constant 1 : i32
    %206 = arith.cmpi eq, %arg2, %c1_i32_125 : i32
    %207 = arith.extui %206 : i1 to i32
    %c0_i32_126 = arith.constant 0 : i32
    %208 = arith.cmpi ne, %207, %c0_i32_126 : i32
    scf.if %208 {
      %c0_127 = arith.constant 0 : index
      %c0_128 = arith.constant 0 : index
      %c0_129 = arith.constant 0 : index
      %209 = vector.load %arg11[%c0_127, %c0_128, %c0_129] : memref<1x8x128xf32, #tpu.memory_space<vmem>>, vector<1x8x128xf32>
      %cst_130 = arith.constant dense<0.000000e+00> : vector<1x8xf32>
      %210 = vector.multi_reduction <add>, %209, %cst_130 [2] : vector<1x8x128xf32> to vector<1x8xf32>
      %211 = vector.shape_cast %210 : vector<1x8xf32> to vector<1x8x1xf32>
      %cst_131 = arith.constant dense<0.000000e+00> : vector<1x1xf32>
      %212 = vector.multi_reduction <add>, %211, %cst_131 [1] : vector<1x8x1xf32> to vector<1x1xf32>
      %213 = vector.shape_cast %212 : vector<1x1xf32> to vector<1x1x1xf32>
      %c0_132 = arith.constant 0 : index
      %c0_133 = arith.constant 0 : index
      %c0_134 = arith.constant 0 : index
      %c0_135 = arith.constant 0 : index
      %214 = vector.load %arg7[%c0_132, %c0_133, %c0_134, %c0_135] : memref<1x1x1x1xf32, #tpu.memory_space<vmem>>, vector<1x1x1x1xf32>
      %215 = vector.shape_cast %214 : vector<1x1x1x1xf32> to vector<1x1x1xf32>
      %216 = vector.shape_cast %213 : vector<1x1x1xf32> to vector<1x1x1x1xf32>
      tpu.vector_store %arg7[%c0_132, %c0_133, %c0_134, %c0_135], %216 {strides = array<i32>} : memref<1x1x1x1xf32, #tpu.memory_space<vmem>>, vector<1x1x1x1xf32>,
      %c0_136 = arith.constant 0 : index
      %c0_137 = arith.constant 0 : index
      %c0_138 = arith.constant 0 : index
      %217 = vector.load %arg12[%c0_136, %c0_137, %c0_138] : memref<4x8x128xf32, #tpu.memory_space<vmem>>, vector<4x8x128xf32>
      %cst_139 = arith.constant dense<0.000000e+00> : vector<4x8xf32>
      %218 = vector.multi_reduction <add>, %217, %cst_139 [2] : vector<4x8x128xf32> to vector<4x8xf32>
      %219 = vector.shape_cast %218 : vector<4x8xf32> to vector<4x8x1xf32>
      %cst_140 = arith.constant dense<0.000000e+00> : vector<4x1xf32>
      %220 = vector.multi_reduction <add>, %219, %cst_140 [1] : vector<4x8x1xf32> to vector<4x1xf32>
      %221 = vector.shape_cast %220 : vector<4x1xf32> to vector<4x1x1xf32>
      %c0_141 = arith.constant 0 : index
      %c0_142 = arith.constant 0 : index
      %c0_143 = arith.constant 0 : index
      %c0_144 = arith.constant 0 : index
      %c0_145 = arith.constant 0 : index
      %222 = vector.load %arg8[%c0_141, %c0_142, %c0_143, %c0_144, %c0_145] : memref<1x1x4x1x1xf32, #tpu.memory_space<vmem>>, vector<1x1x4x1x1xf32>
      %223 = vector.shape_cast %222 : vector<1x1x4x1x1xf32> to vector<4x1x1xf32>
      %224 = vector.shape_cast %221 : vector<4x1x1xf32> to vector<1x1x4x1x1xf32>
      tpu.vector_store %arg8[%c0_141, %c0_142, %c0_143, %c0_144, %c0_145], %224 {strides = array<i32>} : memref<1x1x4x1x1xf32, #tpu.memory_space<vmem>>, vector<1x1x4x1x1xf32>,
      %c0_146 = arith.constant 0 : index
      %c0_147 = arith.constant 0 : index
      %c0_148 = arith.constant 0 : index
      %225 = vector.load %arg13[%c0_146, %c0_147, %c0_148] : memref<4x8x128xf32, #tpu.memory_space<vmem>>, vector<4x8x128xf32>
      %cst_149 = arith.constant dense<0.000000e+00> : vector<4x8xf32>
      %226 = vector.multi_reduction <add>, %225, %cst_149 [2] : vector<4x8x128xf32> to vector<4x8xf32>
      %227 = vector.shape_cast %226 : vector<4x8xf32> to vector<4x8x1xf32>
      %cst_150 = arith.constant dense<0.000000e+00> : vector<4x1xf32>
      %228 = vector.multi_reduction <add>, %227, %cst_150 [1] : vector<4x8x1xf32> to vector<4x1xf32>
      %229 = vector.shape_cast %228 : vector<4x1xf32> to vector<4x1x1xf32>
      %c0_151 = arith.constant 0 : index
      %c0_152 = arith.constant 0 : index
      %c0_153 = arith.constant 0 : index
      %c0_154 = arith.constant 0 : index
      %c0_155 = arith.constant 0 : index
      %230 = vector.load %arg9[%c0_151, %c0_152, %c0_153, %c0_154, %c0_155] : memref<1x1x4x1x1xf32, #tpu.memory_space<vmem>>, vector<1x1x4x1x1xf32>
      %231 = vector.shape_cast %230 : vector<1x1x4x1x1xf32> to vector<4x1x1xf32>
      %232 = vector.shape_cast %229 : vector<4x1x1xf32> to vector<1x1x4x1x1xf32>
      tpu.vector_store %arg9[%c0_151, %c0_152, %c0_153, %c0_154, %c0_155], %232 {strides = array<i32>} : memref<1x1x4x1x1xf32, #tpu.memory_space<vmem>>, vector<1x1x4x1x1xf32>,
      %c0_156 = arith.constant 0 : index
      %c0_157 = arith.constant 0 : index
      %c0_158 = arith.constant 0 : index
      %233 = vector.load %arg14[%c0_156, %c0_157, %c0_158] : memref<4x8x128xf32, #tpu.memory_space<vmem>>, vector<4x8x128xf32>
      %cst_159 = arith.constant dense<0.000000e+00> : vector<4x8xf32>
      %234 = vector.multi_reduction <add>, %233, %cst_159 [2] : vector<4x8x128xf32> to vector<4x8xf32>
      %235 = vector.shape_cast %234 : vector<4x8xf32> to vector<4x8x1xf32>
      %cst_160 = arith.constant dense<0.000000e+00> : vector<4x1xf32>
      %236 = vector.multi_reduction <add>, %235, %cst_160 [1] : vector<4x8x1xf32> to vector<4x1xf32>
      %237 = vector.shape_cast %236 : vector<4x1xf32> to vector<4x1x1xf32>
      %c0_161 = arith.constant 0 : index
      %c0_162 = arith.constant 0 : index
      %c0_163 = arith.constant 0 : index
      %c0_164 = arith.constant 0 : index
      %c0_165 = arith.constant 0 : index
      %238 = vector.load %arg10[%c0_161, %c0_162, %c0_163, %c0_164, %c0_165] : memref<1x1x4x1x1xf32, #tpu.memory_space<vmem>>, vector<1x1x4x1x1xf32>
      %239 = vector.shape_cast %238 : vector<1x1x4x1x1xf32> to vector<4x1x1xf32>
      %240 = vector.shape_cast %237 : vector<4x1x1xf32> to vector<1x1x4x1x1xf32>
      tpu.vector_store %arg10[%c0_161, %c0_162, %c0_163, %c0_164, %c0_165], %240 {strides = array<i32>} : memref<1x1x4x1x1xf32, #tpu.memory_space<vmem>>, vector<1x1x4x1x1xf32>,
    } else {
    }
    return
  }
  func.func @transform_0(%arg0: i32, %arg1: i32, %arg2: i32, %arg3: memref<8xi32, #tpu.memory_space<smem>>, %arg4: memref<2xi32, #tpu.memory_space<smem>>) -> (i32, i32, i32, i32) {
    %c2_i32 = arith.constant 2 : i32
    %0 = arith.muli %arg1, %c2_i32 : i32
    %1 = arith.addi %0, %arg2 : i32
    %c0_i32 = arith.constant 0 : i32
    %c0_i32_0 = arith.constant 0 : i32
    %c0_i32_1 = arith.constant 0 : i32
    return %arg0, %c0_i32, %1, %c0_i32_0 : i32, i32, i32, i32
  }
  func.func @transform_1(%arg0: i32, %arg1: i32, %arg2: i32, %arg3: memref<8xi32, #tpu.memory_space<smem>>, %arg4: memref<2xi32, #tpu.memory_space<smem>>) -> (i32, i32, i32) {
    %c2_i32 = arith.constant 2 : i32
    %0 = arith.muli %arg1, %c2_i32 : i32
    %1 = arith.addi %0, %arg2 : i32
    %c0_i32 = arith.constant 0 : i32
    %c0_i32_0 = arith.constant 0 : i32
    return %arg0, %1, %c0_i32 : i32, i32, i32
  }
  func.func @transform_2(%arg0: i32, %arg1: i32, %arg2: i32, %arg3: memref<8xi32, #tpu.memory_space<smem>>, %arg4: memref<2xi32, #tpu.memory_space<smem>>) -> (i32, i32, i32, i32) {
    %c0_i32 = arith.constant 0 : i32
    %c0_i32_0 = arith.constant 0 : i32
    %c0_i32_1 = arith.constant 0 : i32
    return %arg0, %arg1, %c0_i32, %c0_i32_0 : i32, i32, i32, i32
  }
  func.func @transform_3(%arg0: i32, %arg1: i32, %arg2: i32, %arg3: memref<8xi32, #tpu.memory_space<smem>>, %arg4: memref<2xi32, #tpu.memory_space<smem>>) -> (i32, i32, i32, i32, i32) {
    %c0_i32 = arith.constant 0 : i32
    %c0_i32_0 = arith.constant 0 : i32
    %c0_i32_1 = arith.constant 0 : i32
    %c0_i32_2 = arith.constant 0 : i32
    return %arg0, %arg1, %c0_i32, %c0_i32_0, %c0_i32_1 : i32, i32, i32, i32, i32
  }
  func.func @transform_4(%arg0: i32, %arg1: i32, %arg2: i32, %arg3: memref<8xi32, #tpu.memory_space<smem>>, %arg4: memref<2xi32, #tpu.memory_space<smem>>) -> (i32, i32, i32, i32, i32) {
    %c0_i32 = arith.constant 0 : i32
    %c0_i32_0 = arith.constant 0 : i32
    %c0_i32_1 = arith.constant 0 : i32
    %c0_i32_2 = arith.constant 0 : i32
    return %arg0, %arg1, %c0_i32, %c0_i32_0, %c0_i32_1 : i32, i32, i32, i32, i32
  }
  func.func @transform_5(%arg0: i32, %arg1: i32, %arg2: i32, %arg3: memref<8xi32, #tpu.memory_space<smem>>, %arg4: memref<2xi32, #tpu.memory_space<smem>>) -> (i32, i32, i32, i32, i32) {
    %c0_i32 = arith.constant 0 : i32
    %c0_i32_0 = arith.constant 0 : i32
    %c0_i32_1 = arith.constant 0 : i32
    %c0_i32_2 = arith.constant 0 : i32
    return %arg0, %arg1, %c0_i32, %c0_i32_0, %c0_i32_1 : i32, i32, i32, i32, i32
  }
}

</mosaic_0001>

<llo_original>
// kernel: tpu_custom_call.1
$region0: #{tpu_custom_call.1}
  #allocation0 [shape = 'u32[]', space=smem, size = 0x4, offset = 0x4, fixed_abs, tag = 'smem constant byte address 0x4 - core index']
  #allocation1 [shape = 'u32[144,128]{1,0:T(1,128)}', space=vmem, size = 0x12000, scoped, tag = 'internal scratch']
  #allocation2 [shape = 'f32[1,8,128]{2,1,0:T(8,128)}', space=vmem, size = 0x1000, scoped, tag = 'scratch operand']
  #allocation3 [shape = 'f32[4,8,128]{2,1,0:T(8,128)}', space=vmem, size = 0x4000, scoped, tag = 'scratch operand']
  #allocation4 [shape = 'f32[4,8,128]{2,1,0:T(8,128)}', space=vmem, size = 0x4000, scoped, tag = 'scratch operand']
  #allocation5 [shape = 'f32[4,8,128]{2,1,0:T(8,128)}', space=vmem, size = 0x4000, scoped, tag = 'scratch operand']
  #allocation6 [shape = 's32[1]{0}', space=sflag, size = 0x4, scoped, tag = 'scoped memory for tpu_custom_call.1']
  #allocation7 [shape = 'u8[512]{0}', space=smem, size = 0x200, scoped, tag = 'prefetched SMEM operand 0']
  #allocation8 [shape = 'u8[512]{0}', space=smem, size = 0x200, scoped, tag = 'prefetched SMEM operand 1']
  %s0 = inlined_call_operand.hbm [shape: s32[8], index: 0, kind: input, shape index: {}]
  %s1 = inlined_call_operand.vmem [shape: s32[2], index: 1, kind: input, shape index: {}]
  %s2 = inlined_call_operand.hbm [shape: f32[2,4,16,128], index: 2, kind: input, shape index: {}]
  %s3 = inlined_call_operand.hbm [shape: s32[2,16,128], index: 3, kind: input, shape index: {}]
  %s4 = inlined_call_operand.vmem [shape: f32[2,1,1,1], index: 4, kind: output, shape index: {0}]
  %s5 = inlined_call_operand.vmem [shape: f32[2,1,4,1,1], index: 5, kind: output, shape index: {1}]
  %s6 = inlined_call_operand.vmem [shape: f32[2,1,4,1,1], index: 6, kind: output, shape index: {2}]
  %s7 = inlined_call_operand.vmem [shape: f32[2,1,4,1,1], index: 7, kind: output, shape index: {3}]
  %8 = xla_tuple %s4, %s5, %s6, %s7
  %s9 = sld [smem:[#allocation0]]
  $region81: #{tpu_custom_call.1} parent=0
    _
  %s11 = ssub.s32 1, %s9
  %s12 = scalar_select 0, %s11, %s9
  %14 = dma.hbm_to_smem %s0, 16, [#allocation7], [#allocation6]
  %s15 = sshll.u32 %s1, 4
  %s16 = int_to_ptr.vmem [resolvable:$true] %s15
  %18 = dma.vmem_to_smem %s16, 16, [#allocation8], [#allocation6]
  %19 = dma.done [#allocation6], 32
  %20 = sfence
  $region1: #{tpu_custom_call.1} parent=0
    #allocation9 [shape = 'u8[32768]{0}', space=vmem, size = 0x8000, scoped, tag = 'input window, operand 2']
    #allocation10 [shape = 's32[2]{0}', space=sflag, size = 0x8, scoped, tag = 'scoped memory for tpu_custom_call.1']
    #allocation11 [shape = 'u8[8192]{0}', space=vmem, size = 0x2000, scoped, tag = 'input window, operand 3']
    #allocation12 [shape = 's32[2]{0}', space=sflag, size = 0x8, scoped, tag = 'scoped memory for tpu_custom_call.1']
    %21 = vsyncpa [#allocation10], 0
    %s22 = scalar_lea.sflag [#allocation10], 1
    %23 = vsyncpa %s22, 0
    %24 = vsyncpa [#allocation12], 0
    %s25 = scalar_lea.sflag [#allocation12], 1
    %26 = vsyncpa %s25, 0
    loop: start=0, step=1, limit=6
    $region2: #{tpu_custom_call.1} parent=1 // loop_pre_header
      _
    $region3: #{tpu_custom_call.1} parent=1 // loop_header
      %s28 = sphi 0, %s32
      %p29 = scmp.ge.s32.totalorder %s28, 6
      %s35 = sphi 0, %s54
      %s36 = sphi 0, %s50
      %s37 = sphi 0, %s46
      %s38 = sphi 0, %s35
      %s39 = sphi 0, %s36
      %s40 = sphi 0, %s37
      %s41 = sphi 0, %s38
      %s42 = sphi 0, %s39
      %s43 = sphi 0, %s40
      %s63 = sphi 0, %s65
      %s66 = sphi 0, %s63
      %s67 = sphi 0, %s66
      %s83 = sphi 0, %s67
      %s95 = sphi 0, %s97
      %s98 = sphi 0, %s95
      %s99 = sphi 0, %s98
      %s115 = sphi 0, %s99
      %s123 = sphi 0, %s125
      %s126 = sphi 0, %s123
      %s127 = sphi 0, %s126
      %s143 = sphi 0, %s127
      %s151 = sphi 0, %s153
      %s154 = sphi 0, %s151
      %s155 = sphi 0, %s154
      %s171 = sphi 0, %s155
      %s179 = sphi 0, %s181
      %s182 = sphi 0, %s179
      %s183 = sphi 0, %s182
      %s199 = sphi 0, %s183
      %s207 = sphi 0, %s209
      %s210 = sphi 0, %s207
      %s211 = sphi 0, %s210
      %s227 = sphi 0, %s211
    $region4: #{tpu_custom_call.1} parent=1 // loop_header_branch
      %31 = sbr.rel (%p29) target = $region8
    $region5: #{tpu_custom_call.1} parent=1 // loop_body
      %s33 = ssub.s32 %s28, 1
      %s34 = ssub.s32 %s28, 2
      %s44 = sadd.s32 1, %s37
      %p45 = scmp.ge.s32.totalorder %s44, 2
      %s46 = scalar_select %p45, 0, %s44
      %s47 = sadd.s32 1, %s36
      %s48 = scalar_select %p45, %s47, %s36
      %p49 = scmp.ge.s32.totalorder %s48, 1
      %s50 = scalar_select %p49, 0, %s48
      %s51 = sadd.s32 1, %s35
      %s52 = scalar_select %p49, %s51, %s35
      %p53 = scmp.ge.s32.totalorder %s52, 2
      %s54 = scalar_select %p53, 0, %s52
      %s55 = smul.u32 %s36, 2
      %s56 = sadd.s32 %s55, %s37
      %s57 = smul.u32 %s50, 2
      %s58 = sadd.s32 %s57, %s46
      %s59 = ssub.s32 %s35, %s54
      %s60 = ssub.s32 %s56, %s58
      %s61 = sor.u32 %s59, %s60
      %p62 = scmp.eq.s32.totalorder %s61, 0
      %s64 = sadd.s32 %s63, 1
      %s65 = scalar_select %p62, %s63, %s64
      %p68 = pneg %p62
      %p69 = scmp.eq.s32.totalorder %s28, 3
      %p70 = por %p68, %p69
      %p71 = scmp.ne.s32.totalorder %s63, %s66
      %p72 = scmp.eq.s32.totalorder %s28, 0
      %p73 = por %p71, %p72
      %p74 = scmp.ne.s32.totalorder %s63, %s66
      %p75 = scmp.eq.s32.totalorder %s33, 3
      %p76 = por %p74, %p75
      %p77 = scmp.ne.s32.totalorder %s66, %s67
      %p78 = scmp.eq.s32.totalorder %s33, 0
      %p79 = por %p77, %p78
      %p80 = scmp.ne.s32.totalorder %s66, %s67
      %p81 = scmp.eq.s32.totalorder %s34, 3
      %p82 = por %p80, %p81
      %p84 = scmp.ne.s32.totalorder %s67, %s83
      %p85 = scmp.eq.s32.totalorder %s34, 0
      %p86 = por %p84, %p85
      %s87 = smul.u32 %s36, 2
      %s88 = sadd.s32 %s87, %s37
      %s89 = smul.u32 %s50, 2
      %s90 = sadd.s32 %s89, %s46
      %s91 = ssub.s32 %s35, %s54
      %s92 = ssub.s32 %s88, %s90
      %s93 = sor.u32 %s91, %s92
      %p94 = scmp.eq.s32.totalorder %s93, 0
      %s96 = sadd.s32 %s95, 1
      %s97 = scalar_select %p94, %s95, %s96
      %p100 = pneg %p94
      %p101 = scmp.eq.s32.totalorder %s28, 3
      %p102 = por %p100, %p101
      %p103 = scmp.ne.s32.totalorder %s95, %s98
      %p104 = scmp.eq.s32.totalorder %s28, 0
      %p105 = por %p103, %p104
      %p106 = scmp.ne.s32.totalorder %s95, %s98
      %p107 = scmp.eq.s32.totalorder %s33, 3
      %p108 = por %p106, %p107
      %p109 = scmp.ne.s32.totalorder %s98, %s99
      %p110 = scmp.eq.s32.totalorder %s33, 0
      %p111 = por %p109, %p110
      %p112 = scmp.ne.s32.totalorder %s98, %s99
      %p113 = scmp.eq.s32.totalorder %s34, 3
      %p114 = por %p112, %p113
      %p116 = scmp.ne.s32.totalorder %s99, %s115
      %p117 = scmp.eq.s32.totalorder %s34, 0
      %p118 = por %p116, %p117
      %s119 = ssub.s32 %s35, %s54
      %s120 = ssub.s32 %s36, %s50
      %s121 = sor.u32 %s119, %s120
      %p122 = scmp.eq.s32.totalorder %s121, 0
      %s124 = sadd.s32 %s123, 1
      %s125 = scalar_select %p122, %s123, %s124
      %p128 = pneg %p122
      %p129 = scmp.eq.s32.totalorder %s28, 3
      %p130 = por %p128, %p129
      %p131 = scmp.ne.s32.totalorder %s123, %s126
      %p132 = scmp.eq.s32.totalorder %s28, 0
      %p133 = por %p131, %p132
      %p134 = scmp.ne.s32.totalorder %s123, %s126
      %p135 = scmp.eq.s32.totalorder %s33, 3
      %p136 = por %p134, %p135
      %p137 = scmp.ne.s32.totalorder %s126, %s127
      %p138 = scmp.eq.s32.totalorder %s33, 0
      %p139 = por %p137, %p138
      %p140 = scmp.ne.s32.totalorder %s126, %s127
      %p141 = scmp.eq.s32.totalorder %s34, 3
      %p142 = por %p140, %p141
      %p144 = scmp.ne.s32.totalorder %s127, %s143
      %p145 = scmp.eq.s32.totalorder %s34, 0
      %p146 = por %p144, %p145
      %s147 = ssub.s32 %s35, %s54
      %s148 = ssub.s32 %s36, %s50
      %s149 = sor.u32 %s147, %s148
      %p150 = scmp.eq.s32.totalorder %s149, 0
      %s152 = sadd.s32 %s151, 1
      %s153 = scalar_select %p150, %s151, %s152
      %p156 = pneg %p150
      %p157 = scmp.eq.s32.totalorder %s28, 3
      %p158 = por %p156, %p157
      %p159 = scmp.ne.s32.totalorder %s151, %s154
      %p160 = scmp.eq.s32.totalorder %s28, 0
      %p161 = por %p159, %p160
      %p162 = scmp.ne.s32.totalorder %s151, %s154
      %p163 = scmp.eq.s32.totalorder %s33, 3
      %p164 = por %p162, %p163
      %p165 = scmp.ne.s32.totalorder %s154, %s155
      %p166 = scmp.eq.s32.totalorder %s33, 0
      %p167 = por %p165, %p166
      %p168 = scmp.ne.s32.totalorder %s154, %s155
      %p169 = scmp.eq.s32.totalorder %s34, 3
      %p170 = por %p168, %p169
      %p172 = scmp.ne.s32.totalorder %s155, %s171
      %p173 = scmp.eq.s32.totalorder %s34, 0
      %p174 = por %p172, %p173
      %s175 = ssub.s32 %s35, %s54
      %s176 = ssub.s32 %s36, %s50
      %s177 = sor.u32 %s175, %s176
      %p178 = scmp.eq.s32.totalorder %s177, 0
      %s180 = sadd.s32 %s179, 1
      %s181 = scalar_select %p178, %s179, %s180
      %p184 = pneg %p178
      %p185 = scmp.eq.s32.totalorder %s28, 3
      %p186 = por %p184, %p185
      %p187 = scmp.ne.s32.totalorder %s179, %s182
      %p188 = scmp.eq.s32.totalorder %s28, 0
      %p189 = por %p187, %p188
      %p190 = scmp.ne.s32.totalorder %s179, %s182
      %p191 = scmp.eq.s32.totalorder %s33, 3
      %p192 = por %p190, %p191
      %p193 = scmp.ne.s32.totalorder %s182, %s183
      %p194 = scmp.eq.s32.totalorder %s33, 0
      %p195 = por %p193, %p194
      %p196 = scmp.ne.s32.totalorder %s182, %s183
      %p197 = scmp.eq.s32.totalorder %s34, 3
      %p198 = por %p196, %p197
      %p200 = scmp.ne.s32.totalorder %s183, %s199
      %p201 = scmp.eq.s32.totalorder %s34, 0
      %p202 = por %p200, %p201
      %s203 = ssub.s32 %s35, %s54
      %s204 = ssub.s32 %s36, %s50
      %s205 = sor.u32 %s203, %s204
      %p206 = scmp.eq.s32.totalorder %s205, 0
      %s208 = sadd.s32 %s207, 1
      %s209 = scalar_select %p206, %s207, %s208
      %p212 = pneg %p206
      %p213 = scmp.eq.s32.totalorder %s28, 3
      %p214 = por %p212, %p213
      %p215 = scmp.ne.s32.totalorder %s207, %s210
      %p216 = scmp.eq.s32.totalorder %s28, 0
      %p217 = por %p215, %p216
      %p218 = scmp.ne.s32.totalorder %s207, %s210
      %p219 = scmp.eq.s32.totalorder %s33, 3
      %p220 = por %p218, %p219
      %p221 = scmp.ne.s32.totalorder %s210, %s211
      %p222 = scmp.eq.s32.totalorder %s33, 0
      %p223 = por %p221, %p222
      %p224 = scmp.ne.s32.totalorder %s210, %s211
      %p225 = scmp.eq.s32.totalorder %s34, 3
      %p226 = por %p224, %p225
      %p228 = scmp.ne.s32.totalorder %s211, %s227
      %p229 = scmp.eq.s32.totalorder %s34, 0
      %p230 = por %p228, %p229
      %p231 = scmp.le.s32.totalorder 1, %s28
      %p232 = scmp.lt.s32.totalorder %s28, 5
      %p233 = pnand %p231, %p232
      %p234 = pneg %p233
      // Predicated region
      $region9: #{tpu_custom_call.1} parent=5 // pred_check
        _
      $region10: #{tpu_custom_call.1} parent=5 // pred_check_branch
        %236 = sbr.rel (%p233) target = $region12
      $region11: #{tpu_custom_call.1} parent=5 // pred_region
        %s237 = ssub.s32 %s28, 1
      $region12: #{tpu_custom_call.1} parent=5 // pred_fallthru
        _
      %p238 = scmp.lt.s32.totalorder %s28, 4
      // Predicated region
      $region13: #{tpu_custom_call.1} parent=5 // pred_check
        %p239 = pneg %p238
      $region14: #{tpu_custom_call.1} parent=5 // pred_check_branch
        %241 = sbr.rel (%p239) target = $region16
      $region15: #{tpu_custom_call.1} parent=5 // pred_region
        // Predicated region
        $region17: #{tpu_custom_call.1} parent=15 // pred_check
          %p242 = pneg %p73
        $region18: #{tpu_custom_call.1} parent=15 // pred_check_branch
          %244 = sbr.rel (%p242) target = $region20
        $region19: #{tpu_custom_call.1} parent=15 // pred_region
          %s245 = sand.u32 %s63, 1
          %s246 = scalar_lea.sflag [#allocation10], %s245
          %s247 = sand.u32 %s63, 1
          %s248 = smul.addr %s247, 32
          %s249 = scalar_lea.vmem [#allocation9], %s248
          %s250 = smul.u32 %s36, 2
          %s251 = sadd.s32 %s250, %s37
          %s253 = ssub.s32 512, 512
          %254 = vsyncadd %s246, %s253
          %s255 = smul.addr %s35, 8
          %s256 = sadd.s32 %s251, %s255
          %s257 = smul.addr %s256, 128
          %s258 = scalar_lea.hbm %s2, %s257
          %s259 = sshll.u32 %s249, 4
          %s260 = int_to_ptr.vmem [resolvable:$true] %s259
          %265 = dma.hbm_to_vmem [thread:$0]  %s258, 512, %s260, %s246, 256, 128, 8
        $region20: #{tpu_custom_call.1} parent=15 // pred_fallthru
          _
        // Predicated region
        $region21: #{tpu_custom_call.1} parent=15 // pred_check
          %p266 = pneg %p105
        $region22: #{tpu_custom_call.1} parent=15 // pred_check_branch
          %268 = sbr.rel (%p266) target = $region24
        $region23: #{tpu_custom_call.1} parent=15 // pred_region
          %s269 = sand.u32 %s95, 1
          %s270 = scalar_lea.sflag [#allocation12], %s269
          %s271 = sand.u32 %s95, 1
          %s272 = smul.addr %s271, 8
          %s273 = scalar_lea.vmem [#allocation11], %s272
          %s274 = smul.u32 %s36, 2
          %s275 = sadd.s32 %s274, %s37
          %s277 = ssub.s32 128, 128
          %278 = vsyncadd %s270, %s277
          %s279 = smul.addr %s35, 2
          %s280 = sadd.s32 %s275, %s279
          %s281 = smul.addr %s280, 128
          %s282 = scalar_lea.hbm %s3, %s281
          %s284 = sshll.u32 %s273, 4
          %s285 = int_to_ptr.vmem [resolvable:$true] %s284
          %287 = dma.hbm_to_vmem [thread:$0]  %s282, 128, %s285, %s270
        $region24: #{tpu_custom_call.1} parent=15 // pred_fallthru
          _
      $region16: #{tpu_custom_call.1} parent=5 // pred_fallthru
        _
      %p288 = scmp.le.s32.totalorder 1, %s28
      %p289 = scmp.lt.s32.totalorder %s28, 5
      %p290 = pnand %p288, %p289
      %p291 = pneg %p290
      // Predicated region
      $region25: #{tpu_custom_call.1} parent=5 // pred_check
        _
      $region26: #{tpu_custom_call.1} parent=5 // pred_check_branch
        %293 = sbr.rel (%p290) target = $region28
      $region27: #{tpu_custom_call.1} parent=5 // pred_region
        %s294 = ssub.s32 %s28, 1
        %s295 = sand.u32 %s66, 1
        %s296 = scalar_lea.sflag [#allocation10], %s295
        %s297 = sand.u32 %s66, 1
        %s298 = smul.addr %s297, 32
        %s299 = scalar_lea.vmem [#allocation9], %s298
        // Predicated region
        $region29: #{tpu_custom_call.1} parent=27 // pred_check
          %p300 = pneg %p79
        $region30: #{tpu_custom_call.1} parent=27 // pred_check_branch
          %302 = sbr.rel (%p300) target = $region32
        $region31: #{tpu_custom_call.1} parent=27 // pred_region
          %303 = dma.done %s296, 512
        $region32: #{tpu_custom_call.1} parent=27 // pred_fallthru
          _
        %s304 = sand.u32 %s98, 1
        %s305 = scalar_lea.sflag [#allocation12], %s304
        %s306 = sand.u32 %s98, 1
        %s307 = smul.addr %s306, 8
        %s308 = scalar_lea.vmem [#allocation11], %s307
        // Predicated region
        $region33: #{tpu_custom_call.1} parent=27 // pred_check
          %p309 = pneg %p111
        $region34: #{tpu_custom_call.1} parent=27 // pred_check_branch
          %311 = sbr.rel (%p309) target = $region36
        $region35: #{tpu_custom_call.1} parent=27 // pred_region
          %312 = dma.done %s305, 128
        $region36: #{tpu_custom_call.1} parent=27 // pred_fallthru
          _
        %s313 = sand.u32 %s66, 1
        %s314 = scalar_lea.sflag [#allocation10], %s313
        %s315 = sand.u32 %s66, 1
        %s316 = smul.addr %s315, 32
        %s317 = scalar_lea.vmem [#allocation9], %s316
        %p318 = pneg %p79
        %p319 = pneg %p76
        %s320 = sand.u32 %s98, 1
        %s321 = scalar_lea.sflag [#allocation12], %s320
        %s322 = sand.u32 %s98, 1
        %s323 = smul.addr %s322, 8
        %s324 = scalar_lea.vmem [#allocation11], %s323
        %p325 = pneg %p111
        %p326 = pneg %p108
        %p327 = pneg %p139
        %p328 = pneg %p136
        %p329 = scmp.lt.s32.totalorder %s38, 1
        %s330 = scalar_select %p329, %s38, 1
        %p331 = scmp.lt.s32.totalorder %s39, 0
        %s332 = scalar_select %p331, %s39, 0
        %s333 = sadd.s32 %s332, %s330
        %s334 = scalar_lea.vmem %s4, %s333
        %p335 = pneg %p167
        %p336 = pneg %p164
        %p337 = scmp.lt.s32.totalorder %s38, 1
        %s338 = scalar_select %p337, %s38, 1
        %p339 = scmp.lt.s32.totalorder %s39, 0
        %s340 = scalar_select %p339, %s39, 0
        %s341 = smul.addr %s340, 4
        %s342 = smul.addr %s338, 4
        %s343 = sadd.s32 %s341, %s342
        %s344 = scalar_lea.vmem %s5, %s343
        %p345 = pneg %p195
        %p346 = pneg %p192
        %p347 = scmp.lt.s32.totalorder %s38, 1
        %s348 = scalar_select %p347, %s38, 1
        %p349 = scmp.lt.s32.totalorder %s39, 0
        %s350 = scalar_select %p349, %s39, 0
        %s351 = smul.addr %s350, 4
        %s352 = smul.addr %s348, 4
        %s353 = sadd.s32 %s351, %s352
        %s354 = scalar_lea.vmem %s6, %s353
        %p355 = pneg %p223
        %p356 = pneg %p220
        %p357 = scmp.lt.s32.totalorder %s38, 1
        %s358 = scalar_select %p357, %s38, 1
        %p359 = scmp.lt.s32.totalorder %s39, 0
        %s360 = scalar_select %p359, %s39, 0
        %s361 = smul.addr %s360, 4
        %s362 = smul.addr %s358, 4
        %s363 = sadd.s32 %s361, %s362
        %s364 = scalar_lea.vmem %s7, %s363
        %s365 = smul.u32 %s39, 2
        %s366 = sadd.s32 %s365, %s40
        %s367 = smul.u32 %s39, 2
        %s368 = sadd.s32 %s367, %s40
        %p369 = scmp.lt.s32.totalorder %s38, 1
        %s370 = scalar_select %p369, %s38, 1
        %p371 = scmp.lt.s32.totalorder %s39, 0
        %s372 = scalar_select %p371, %s39, 0
        %s373 = sadd.s32 %s372, %s370
        %s374 = scalar_lea.vmem %s4, %s373
        %p375 = scmp.lt.s32.totalorder %s38, 1
        %s376 = scalar_select %p375, %s38, 1
        %p377 = scmp.lt.s32.totalorder %s39, 0
        %s378 = scalar_select %p377, %s39, 0
        %s379 = smul.addr %s378, 4
        %s380 = smul.addr %s376, 4
        %s381 = sadd.s32 %s379, %s380
        %s382 = scalar_lea.vmem %s5, %s381
        %p383 = scmp.lt.s32.totalorder %s38, 1
        %s384 = scalar_select %p383, %s38, 1
        %p385 = scmp.lt.s32.totalorder %s39, 0
        %s386 = scalar_select %p385, %s39, 0
        %s387 = smul.addr %s386, 4
        %s388 = smul.addr %s384, 4
        %s389 = sadd.s32 %s387, %s388
        %s390 = scalar_lea.vmem %s6, %s389
        %p391 = scmp.lt.s32.totalorder %s38, 1
        %s392 = scalar_select %p391, %s38, 1
        %p393 = scmp.lt.s32.totalorder %s39, 0
        %s394 = scalar_select %p393, %s39, 0
        %s395 = smul.addr %s394, 4
        %s396 = smul.addr %s392, 4
        %s397 = sadd.s32 %s395, %s396
        %s398 = scalar_lea.vmem %s7, %s397
        %p399 = scmp.eq.s32.totalorder %s40, 0
        // Predicated region
        $region37: #{tpu_custom_call.1} parent=27 // pred_check
          %p400 = pneg %p399
        $region38: #{tpu_custom_call.1} parent=27 // pred_check_branch
          %402 = sbr.rel (%p400) target = $region40
        $region39: #{tpu_custom_call.1} parent=27 // pred_region
          %403 = vst [vmem:[#allocation2] sm:$0xff] 0.0
          %404 = vst [vmem:[#allocation3] sm:$0xff] 0.0
          %405 = vst [vmem:[#allocation3 + $0x8] sm:$0xff] 0.0
          %406 = vst [vmem:[#allocation3 + $0x10] sm:$0xff] 0.0
          %407 = vst [vmem:[#allocation3 + $0x18] sm:$0xff] 0.0
          %408 = vst [vmem:[#allocation4] sm:$0xff] 0.0
          %409 = vst [vmem:[#allocation4 + $0x8] sm:$0xff] 0.0
          %410 = vst [vmem:[#allocation4 + $0x10] sm:$0xff] 0.0
          %411 = vst [vmem:[#allocation4 + $0x18] sm:$0xff] 0.0
          %412 = vst [vmem:[#allocation5] sm:$0xff] 0.0
          %413 = vst [vmem:[#allocation5 + $0x8] sm:$0xff] 0.0
          %414 = vst [vmem:[#allocation5 + $0x10] sm:$0xff] 0.0
          %415 = vst [vmem:[#allocation5 + $0x18] sm:$0xff] 0.0
        $region40: #{tpu_custom_call.1} parent=27 // pred_fallthru
          _
        %v416 = vld [vmem:[%s308] sm:$0xff]
        %s417 = sld [smem:[#allocation8 + %s38]]
        %s418 = scvt.s32.f32 %s417
        %s419 = smul.u32 %s38, 4
        %s420 = sld [smem:[#allocation7 + %s419]]
        %p421 = scmp.gt.s32.totalorder %s420, 0
        %s422 = sadd.s32 %s419, 1
        %s423 = sld [smem:[#allocation7 + %s422]]
        %p424 = scmp.gt.s32.totalorder %s423, 0
        %s425 = sadd.s32 %s419, 2
        %s426 = sld [smem:[#allocation7 + %s425]]
        %p427 = scmp.gt.s32.totalorder %s426, 0
        %s428 = sadd.s32 %s419, 3
        %s429 = sld [smem:[#allocation7 + %s428]]
        %p430 = scmp.gt.s32.totalorder %s429, 0
        %s431 = scalar_select %p421, 0.0, -1e+30
        %s432 = scalar_select %p424, 0.0, -1e+30
        %s433 = scalar_select %p427, 0.0, -1e+30
        %s434 = scalar_select %p430, 0.0, -1e+30
        %v435 = vld [vmem:[%s299] sm:$0xff]
        %s436 = scalar_lea.vmem %s299, 8 [#allocation9]
        %v437 = vld [vmem:[%s436] sm:$0xff]
        %s438 = scalar_lea.vmem %s299, 16 [#allocation9]
        %v439 = vld [vmem:[%s438] sm:$0xff]
        %s440 = scalar_lea.vmem %s299, 24 [#allocation9]
        %v441 = vld [vmem:[%s440] sm:$0xff]
        %s442 = scalar_select %p424, 0.0, 1.0
        %v443 = vstv %s442
        %v444 = vmul.f32 %v437, %v443
        %v445 = vadd.f32 %v444, 0.0
        %s446 = scalar_select %p427, 0.0, 1.0
        %v447 = vstv %s446
        %v448 = vmul.f32 %v439, %v447
        %v449 = vadd.f32 %v445, %v448
        %s450 = scalar_select %p430, 0.0, 1.0
        %v451 = vstv %s450
        %v452 = vmul.f32 %v441, %v451
        %v453 = vadd.f32 %v449, %v452
        %v454 = vadd.f32 %v435, %v453
        %v455 = vstv %s431
        %v456 = vadd.f32 %v454, %v455
        %v457 = vstv %s432
        %v458 = vadd.f32 %v437, %v457
        %v459 = vstv %s433
        %v460 = vadd.f32 %v439, %v459
        %v461 = vstv %s434
        %v462 = vadd.f32 %v441, %v461
        %v463 = vmax.f32 %v456, %v458
        %v464 = vmax.f32 %v463, %v460
        %v465 = vmax.f32 %v464, %v462
        %v466 = vsub.f32 %v456, %v465
        %v467 = vmul.f32 %v466, 1.442695
        %v468 = vpow.pop %v467
        %v469 = vsub.f32 %v458, %v465
        %v470 = vmul.f32 %v469, 1.442695
        %v471 = vpow.pop %v470
        %v472 = vsub.f32 %v460, %v465
        %v473 = vmul.f32 %v472, 1.442695
        %v474 = vpow.pop %v473
        %v475 = vsub.f32 %v462, %v465
        %v476 = vmul.f32 %v475, 1.442695
        %v477 = vpow.pop %v476
        %v478 = vadd.f32 %v468, %v471
        %v479 = vadd.f32 %v478, %v474
        %v480 = vadd.f32 %v479, %v477
        %v481 = vrcp.pop %v480
        %v482 = vmul.f32 %v480, %v481
        %v483 = vsub.f32 2.0, %v482
        %v484 = vmul.f32 %v481, %v483
        %v485 = vmul.f32 %v468, %v484
        %v486 = vmul.f32 %v471, %v484
        %v487 = vmul.f32 %v474, %v484
        %v488 = vmul.f32 %v477, %v484
        %v489 = vmax.f32 %v465, 0.0
        %v490 = vsub.f32 %v465, %v489
        %v491 = vmul.f32 %v490, 1.442695
        %v492 = vpow.pop %v491
        %v493 = vmul.f32 %v480, %v492
        %v494 = vsub.f32 0.0, %v489
        %v495 = vmul.f32 %v494, 1.442695
        %v496 = vpow.pop %v495
        %v497 = vstv %s418
        %v498 = vmul.f32 %v497, %v496
        %v499 = vadd.f32 %v493, %v498
        %v500 = vlog2.pop %v499
        %v501 = vmul.f32 %v500, 0.6931472
        %v502 = vadd.f32 %v489, %v501
        %v503 = vlog2.pop %v480
        %v504 = vmul.f32 %v503, 0.6931472
        %v505 = vadd.f32 %v465, %v504
        %p506 = scmp.gt.s32.totalorder %s417, 0
        %s507 = scalar_select %p506, 1, 0
        %v508 = vstv %s507
        %vm509 = vcmp.eq.s32.totalorder %v508, 1
        %v510 = vsel %vm509, %v502, %v505
        %vm511 = vcmp.eq.s32.totalorder %v416, 0
        %vm512 = vcmp.eq.s32.totalorder %v416, 1
        %vm513 = vcmp.eq.s32.totalorder %v416, 2
        %vm514 = vcmp.eq.s32.totalorder %v416, 3
        %v515 = vsel %vm511, %v454, 0.0
        %v516 = vsel %vm512, %v437, %v515
        %v517 = vsel %vm513, %v439, %v516
        %v518 = vsel %vm514, %v441, %v517
        %v519 = vsub.f32 %v510, %v518
        %v520 = vld [vmem:[#allocation2] sm:$0xff]
        %v521 = vadd.f32 %v520, %v519
        %522 = vst [vmem:[#allocation2] sm:$0xff] %v521
        %v523 = vsel %vm511, 1, 0
        %v524 = vcvt.s32.f32 %v523
        %v525 = vld [vmem:[#allocation3] sm:$0xff]
        %v526 = vadd.f32 %v525, %v524
        %527 = vst [vmem:[#allocation3] sm:$0xff] %v526
        %v528 = vld [vmem:[#allocation4] sm:$0xff]
        %v529 = vadd.f32 %v528, %v485
        %530 = vst [vmem:[#allocation4] sm:$0xff] %v529
        %v531 = vld [vmem:[#allocation5] sm:$0xff]
        %v532 = vmul.f32 %v524, %v485
        %v533 = vadd.f32 %v531, %v532
        %534 = vst [vmem:[#allocation5] sm:$0xff] %v533
        %v535 = vsel %vm512, 1, 0
        %v536 = vcvt.s32.f32 %v535
        %s537 = scalar_lea.vmem [#allocation3], 8
        %v538 = vld [vmem:[%s537] sm:$0xff]
        %v539 = vadd.f32 %v538, %v536
        %540 = vst [vmem:[%s537] sm:$0xff] %v539
        %s541 = scalar_lea.vmem [#allocation4], 8
        %v542 = vld [vmem:[%s541] sm:$0xff]
        %v543 = vadd.f32 %v542, %v486
        %544 = vst [vmem:[%s541] sm:$0xff] %v543
        %s545 = scalar_lea.vmem [#allocation5], 8
        %v546 = vld [vmem:[%s545] sm:$0xff]
        %v547 = vmul.f32 %v536, %v486
        %v548 = vadd.f32 %v546, %v547
        %549 = vst [vmem:[%s545] sm:$0xff] %v548
        %v550 = vsel %vm513, 1, 0
        %v551 = vcvt.s32.f32 %v550
        %s552 = scalar_lea.vmem [#allocation3], 16
        %v553 = vld [vmem:[%s552] sm:$0xff]
        %v554 = vadd.f32 %v553, %v551
        %555 = vst [vmem:[%s552] sm:$0xff] %v554
        %s556 = scalar_lea.vmem [#allocation4], 16
        %v557 = vld [vmem:[%s556] sm:$0xff]
        %v558 = vadd.f32 %v557, %v487
        %559 = vst [vmem:[%s556] sm:$0xff] %v558
        %s560 = scalar_lea.vmem [#allocation5], 16
        %v561 = vld [vmem:[%s560] sm:$0xff]
        %v562 = vmul.f32 %v551, %v487
        %v563 = vadd.f32 %v561, %v562
        %564 = vst [vmem:[%s560] sm:$0xff] %v563
        %v565 = vsel %vm514, 1, 0
        %v566 = vcvt.s32.f32 %v565
        %s567 = scalar_lea.vmem [#allocation3], 24
        %v568 = vld [vmem:[%s567] sm:$0xff]
        %v569 = vadd.f32 %v568, %v566
        %570 = vst [vmem:[%s567] sm:$0xff] %v569
        %s571 = scalar_lea.vmem [#allocation4], 24
        %v572 = vld [vmem:[%s571] sm:$0xff]
        %v573 = vadd.f32 %v572, %v488
        %574 = vst [vmem:[%s571] sm:$0xff] %v573
        %s575 = scalar_lea.vmem [#allocation5], 24
        %v576 = vld [vmem:[%s575] sm:$0xff]
        %v577 = vmul.f32 %v566, %v488
        %v578 = vadd.f32 %v576, %v577
        %579 = vst [vmem:[%s575] sm:$0xff] %v578
        %p580 = scmp.eq.s32.totalorder %s40, 1
        // Predicated region
        $region41: #{tpu_custom_call.1} parent=27 // pred_check
          %p581 = pneg %p580
        $region42: #{tpu_custom_call.1} parent=27 // pred_check_branch
          %583 = sbr.rel (%p581) target = $region44
        $region43: #{tpu_custom_call.1} parent=27 // pred_region
          %v584 = vld [vmem:[#allocation2] sm:$0xff]
          %585 = vadd.xlane.f32.xlu0 %v584
          %v586 = vpop.xlane.xlu0 %585
          %v587 = vrot.slane %v586, 4
          %v588 = vadd.f32 %v586, %v587
          %v589 = vrot.slane %v588, 2
          %v590 = vadd.f32 %v588, %v589
          %v591 = vrot.slane %v590, 1
          %v592 = vadd.f32 %v590, %v591
          %vm593 = vcmask 0
          %594 = vst.msk [vmem:[%s374] sm:$0x1] %vm593, %v592
          %v595 = vld [vmem:[#allocation3] sm:$0xff]
          %v596 = vld [vmem:[#allocation3 + $0x8] sm:$0xff]
          %v597 = vld [vmem:[#allocation3 + $0x10] sm:$0xff]
          %v598 = vld [vmem:[#allocation3 + $0x18] sm:$0xff]
          %599 = vadd.xlane.f32.xlu0 %v595
          %v600 = vpop.xlane.xlu0 %599
          %601 = vadd.xlane.f32.xlu0 %v596
          %v602 = vpop.xlane.xlu0 %601
          %603 = vadd.xlane.f32.xlu0 %v597
          %v604 = vpop.xlane.xlu0 %603
          %605 = vadd.xlane.f32.xlu0 %v598
          %v606 = vpop.xlane.xlu0 %605
          %v607 = vrot.slane %v600, 4
          %v608 = vadd.f32 %v600, %v607
          %v609 = vrot.slane %v608, 2
          %v610 = vadd.f32 %v608, %v609
          %v611 = vrot.slane %v610, 1
          %v612 = vadd.f32 %v610, %v611
          %v613 = vrot.slane %v602, 4
          %v614 = vadd.f32 %v602, %v613
          %v615 = vrot.slane %v614, 2
          %v616 = vadd.f32 %v614, %v615
          %v617 = vrot.slane %v616, 1
          %v618 = vadd.f32 %v616, %v617
          %v619 = vrot.slane %v604, 4
          %v620 = vadd.f32 %v604, %v619
          %v621 = vrot.slane %v620, 2
          %v622 = vadd.f32 %v620, %v621
          %v623 = vrot.slane %v622, 1
          %v624 = vadd.f32 %v622, %v623
          %v625 = vrot.slane %v606, 4
          %v626 = vadd.f32 %v606, %v625
          %v627 = vrot.slane %v626, 2
          %v628 = vadd.f32 %v626, %v627
          %v629 = vrot.slane %v628, 1
          %v630 = vadd.f32 %v628, %v629
          %631 = vst.msk [vmem:[%s382] sm:$0x1] %vm593, %v612
          %632 = vst.msk [vmem:[%s382 + $0x1] sm:$0x1] %vm593, %v618
          %633 = vst.msk [vmem:[%s382 + $0x2] sm:$0x1] %vm593, %v624
          %634 = vst.msk [vmem:[%s382 + $0x3] sm:$0x1] %vm593, %v630
          %v635 = vld [vmem:[#allocation4] sm:$0xff]
          %v636 = vld [vmem:[#allocation4 + $0x8] sm:$0xff]
          %v637 = vld [vmem:[#allocation4 + $0x10] sm:$0xff]
          %v638 = vld [vmem:[#allocation4 + $0x18] sm:$0xff]
          %639 = vadd.xlane.f32.xlu0 %v635
          %v640 = vpop.xlane.xlu0 %639
          %641 = vadd.xlane.f32.xlu0 %v636
          %v642 = vpop.xlane.xlu0 %641
          %643 = vadd.xlane.f32.xlu0 %v637
          %v644 = vpop.xlane.xlu0 %643
          %645 = vadd.xlane.f32.xlu0 %v638
          %v646 = vpop.xlane.xlu0 %645
          %v647 = vrot.slane %v640, 4
          %v648 = vadd.f32 %v640, %v647
          %v649 = vrot.slane %v648, 2
          %v650 = vadd.f32 %v648, %v649
          %v651 = vrot.slane %v650, 1
          %v652 = vadd.f32 %v650, %v651
          %v653 = vrot.slane %v642, 4
          %v654 = vadd.f32 %v642, %v653
          %v655 = vrot.slane %v654, 2
          %v656 = vadd.f32 %v654, %v655
          %v657 = vrot.slane %v656, 1
          %v658 = vadd.f32 %v656, %v657
          %v659 = vrot.slane %v644, 4
          %v660 = vadd.f32 %v644, %v659
          %v661 = vrot.slane %v660, 2
          %v662 = vadd.f32 %v660, %v661
          %v663 = vrot.slane %v662, 1
          %v664 = vadd.f32 %v662, %v663
          %v665 = vrot.slane %v646, 4
          %v666 = vadd.f32 %v646, %v665
          %v667 = vrot.slane %v666, 2
          %v668 = vadd.f32 %v666, %v667
          %v669 = vrot.slane %v668, 1
          %v670 = vadd.f32 %v668, %v669
          %671 = vst.msk [vmem:[%s390] sm:$0x1] %vm593, %v652
          %672 = vst.msk [vmem:[%s390 + $0x1] sm:$0x1] %vm593, %v658
          %673 = vst.msk [vmem:[%s390 + $0x2] sm:$0x1] %vm593, %v664
          %674 = vst.msk [vmem:[%s390 + $0x3] sm:$0x1] %vm593, %v670
          %v675 = vld [vmem:[#allocation5] sm:$0xff]
          %v676 = vld [vmem:[#allocation5 + $0x8] sm:$0xff]
          %v677 = vld [vmem:[#allocation5 + $0x10] sm:$0xff]
          %v678 = vld [vmem:[#allocation5 + $0x18] sm:$0xff]
          %679 = vadd.xlane.f32.xlu0 %v675
          %v680 = vpop.xlane.xlu0 %679
          %681 = vadd.xlane.f32.xlu0 %v676
          %v682 = vpop.xlane.xlu0 %681
          %683 = vadd.xlane.f32.xlu0 %v677
          %v684 = vpop.xlane.xlu0 %683
          %685 = vadd.xlane.f32.xlu0 %v678
          %v686 = vpop.xlane.xlu0 %685
          %v687 = vrot.slane %v680, 4
          %v688 = vadd.f32 %v680, %v687
          %v689 = vrot.slane %v688, 2
          %v690 = vadd.f32 %v688, %v689
          %v691 = vrot.slane %v690, 1
          %v692 = vadd.f32 %v690, %v691
          %v693 = vrot.slane %v682, 4
          %v694 = vadd.f32 %v682, %v693
          %v695 = vrot.slane %v694, 2
          %v696 = vadd.f32 %v694, %v695
          %v697 = vrot.slane %v696, 1
          %v698 = vadd.f32 %v696, %v697
          %v699 = vrot.slane %v684, 4
          %v700 = vadd.f32 %v684, %v699
          %v701 = vrot.slane %v700, 2
          %v702 = vadd.f32 %v700, %v701
          %v703 = vrot.slane %v702, 1
          %v704 = vadd.f32 %v702, %v703
          %v705 = vrot.slane %v686, 4
          %v706 = vadd.f32 %v686, %v705
          %v707 = vrot.slane %v706, 2
          %v708 = vadd.f32 %v706, %v707
          %v709 = vrot.slane %v708, 1
          %v710 = vadd.f32 %v708, %v709
          %711 = vst.msk [vmem:[%s398] sm:$0x1] %vm593, %v692
          %712 = vst.msk [vmem:[%s398 + $0x1] sm:$0x1] %vm593, %v698
          %713 = vst.msk [vmem:[%s398 + $0x2] sm:$0x1] %vm593, %v704
          %714 = vst.msk [vmem:[%s398 + $0x3] sm:$0x1] %vm593, %v710
        $region44: #{tpu_custom_call.1} parent=27 // pred_fallthru
          _
        %p715 = scmp.lt.s32.totalorder %s38, 1
        %s716 = scalar_select %p715, %s38, 1
        %p717 = scmp.lt.s32.totalorder %s39, 0
        %s718 = scalar_select %p717, %s39, 0
        %s719 = sadd.s32 %s718, %s716
        %s720 = scalar_lea.vmem %s4, %s719
        %p721 = scmp.lt.s32.totalorder %s38, 1
        %s722 = scalar_select %p721, %s38, 1
        %p723 = scmp.lt.s32.totalorder %s39, 0
        %s724 = scalar_select %p723, %s39, 0
        %s725 = smul.addr %s724, 4
        %s726 = smul.addr %s722, 4
        %s727 = sadd.s32 %s725, %s726
        %s728 = scalar_lea.vmem %s5, %s727
        %p729 = scmp.lt.s32.totalorder %s38, 1
        %s730 = scalar_select %p729, %s38, 1
        %p731 = scmp.lt.s32.totalorder %s39, 0
        %s732 = scalar_select %p731, %s39, 0
        %s733 = smul.addr %s732, 4
        %s734 = smul.addr %s730, 4
        %s735 = sadd.s32 %s733, %s734
        %s736 = scalar_lea.vmem %s6, %s735
        %p737 = scmp.lt.s32.totalorder %s38, 1
        %s738 = scalar_select %p737, %s38, 1
        %p739 = scmp.lt.s32.totalorder %s39, 0
        %s740 = scalar_select %p739, %s39, 0
        %s741 = smul.addr %s740, 4
        %s742 = smul.addr %s738, 4
        %s743 = sadd.s32 %s741, %s742
        %s744 = scalar_lea.vmem %s7, %s743
        // Predicated region
        $region45: #{tpu_custom_call.1} parent=27 // pred_check
          %p745 = pneg %p136
        $region46: #{tpu_custom_call.1} parent=27 // pred_check_branch
          %747 = sbr.rel (%p745) target = $region48
        $region47: #{tpu_custom_call.1} parent=27 // pred_region
          _
        $region48: #{tpu_custom_call.1} parent=27 // pred_fallthru
          _
        // Predicated region
        $region49: #{tpu_custom_call.1} parent=27 // pred_check
          %p748 = pneg %p164
        $region50: #{tpu_custom_call.1} parent=27 // pred_check_branch
          %750 = sbr.rel (%p748) target = $region52
        $region51: #{tpu_custom_call.1} parent=27 // pred_region
          _
        $region52: #{tpu_custom_call.1} parent=27 // pred_fallthru
          _
        // Predicated region
        $region53: #{tpu_custom_call.1} parent=27 // pred_check
          %p751 = pneg %p192
        $region54: #{tpu_custom_call.1} parent=27 // pred_check_branch
          %753 = sbr.rel (%p751) target = $region56
        $region55: #{tpu_custom_call.1} parent=27 // pred_region
          _
        $region56: #{tpu_custom_call.1} parent=27 // pred_fallthru
          _
        // Predicated region
        $region57: #{tpu_custom_call.1} parent=27 // pred_check
          %p754 = pneg %p220
        $region58: #{tpu_custom_call.1} parent=27 // pred_check_branch
          %756 = sbr.rel (%p754) target = $region60
        $region59: #{tpu_custom_call.1} parent=27 // pred_region
          _
        $region60: #{tpu_custom_call.1} parent=27 // pred_fallthru
          _
      $region28: #{tpu_custom_call.1} parent=5 // pred_fallthru
        _
      %p757 = scmp.le.s32.totalorder 2, %s28
      // Predicated region
      $region61: #{tpu_custom_call.1} parent=5 // pred_check
        %p758 = pneg %p757
      $region62: #{tpu_custom_call.1} parent=5 // pred_check_branch
        %760 = sbr.rel (%p758) target = $region64
      $region63: #{tpu_custom_call.1} parent=5 // pred_region
        %s761 = ssub.s32 %s28, 2
        // Predicated region
        $region65: #{tpu_custom_call.1} parent=63 // pred_check
          %p762 = pneg %p142
        $region66: #{tpu_custom_call.1} parent=63 // pred_check_branch
          %764 = sbr.rel (%p762) target = $region68
        $region67: #{tpu_custom_call.1} parent=63 // pred_region
          %p765 = scmp.lt.s32.totalorder %s41, 1
          %s766 = scalar_select %p765, %s41, 1
          %p767 = scmp.lt.s32.totalorder %s42, 0
          %s768 = scalar_select %p767, %s42, 0
          %s769 = sadd.s32 %s768, %s766
          %s770 = scalar_lea.vmem %s4, %s769
        $region68: #{tpu_custom_call.1} parent=63 // pred_fallthru
          _
        // Predicated region
        $region69: #{tpu_custom_call.1} parent=63 // pred_check
          %p771 = pneg %p170
        $region70: #{tpu_custom_call.1} parent=63 // pred_check_branch
          %773 = sbr.rel (%p771) target = $region72
        $region71: #{tpu_custom_call.1} parent=63 // pred_region
          %p774 = scmp.lt.s32.totalorder %s41, 1
          %s775 = scalar_select %p774, %s41, 1
          %p776 = scmp.lt.s32.totalorder %s42, 0
          %s777 = scalar_select %p776, %s42, 0
          %s778 = smul.addr %s777, 4
          %s779 = smul.addr %s775, 4
          %s780 = sadd.s32 %s778, %s779
          %s781 = scalar_lea.vmem %s5, %s780
        $region72: #{tpu_custom_call.1} parent=63 // pred_fallthru
          _
        // Predicated region
        $region73: #{tpu_custom_call.1} parent=63 // pred_check
          %p782 = pneg %p198
        $region74: #{tpu_custom_call.1} parent=63 // pred_check_branch
          %784 = sbr.rel (%p782) target = $region76
        $region75: #{tpu_custom_call.1} parent=63 // pred_region
          %p785 = scmp.lt.s32.totalorder %s41, 1
          %s786 = scalar_select %p785, %s41, 1
          %p787 = scmp.lt.s32.totalorder %s42, 0
          %s788 = scalar_select %p787, %s42, 0
          %s789 = smul.addr %s788, 4
          %s790 = smul.addr %s786, 4
          %s791 = sadd.s32 %s789, %s790
          %s792 = scalar_lea.vmem %s6, %s791
        $region76: #{tpu_custom_call.1} parent=63 // pred_fallthru
          _
        // Predicated region
        $region77: #{tpu_custom_call.1} parent=63 // pred_check
          %p793 = pneg %p226
        $region78: #{tpu_custom_call.1} parent=63 // pred_check_branch
          %795 = sbr.rel (%p793) target = $region80
        $region79: #{tpu_custom_call.1} parent=63 // pred_region
          %p796 = scmp.lt.s32.totalorder %s41, 1
          %s797 = scalar_select %p796, %s41, 1
          %p798 = scmp.lt.s32.totalorder %s42, 0
          %s799 = scalar_select %p798, %s42, 0
          %s800 = smul.addr %s799, 4
          %s801 = smul.addr %s797, 4
          %s802 = sadd.s32 %s800, %s801
          %s803 = scalar_lea.vmem %s7, %s802
        $region80: #{tpu_custom_call.1} parent=63 // pred_fallthru
          _
      $region64: #{tpu_custom_call.1} parent=5 // pred_fallthru
        _
    $region6: #{tpu_custom_call.1} parent=1 // loop_footer
      %s32 = sadd.s32 1, %s28
    $region7: #{tpu_custom_call.1} parent=1 // loop_footer_branch
      %27 = sbr.rel target = $region3
    $region8: #{tpu_custom_call.1} parent=1 // loop_exit
      _
    %804 = vsyncpa [#allocation10], 1
    %s805 = scalar_lea.sflag [#allocation10], 1
    %806 = vsyncpa %s805, 1
    %807 = vsyncpa [#allocation12], 1
    %s808 = scalar_lea.sflag [#allocation12], 1
    %809 = vsyncpa %s808, 1

</llo_original>
